<compile_context>
chip_gen: v7x
topology: tpu7x:2x2x1
jax: 0.10.0
libtpu: 0.0.40
codegen_flags: <defaults>
</compile_context>

<pallas_src>
import functools
import math

import jax
import jax.numpy as jnp
from jax import lax
from jax.experimental import pallas as pl
from jax.experimental.pallas import tpu as pltpu

_LN_EPS = 1e-5
_VMEM_LIMIT = 32 * 1024 * 1024  # safe on v5e(128)/v6e(128)/v7x(64) MiB physical VMEM


def _compiler_params(n_parallel_axes: int) -> pltpu.CompilerParams:
    return pltpu.CompilerParams(
        dimension_semantics=("parallel",) * n_parallel_axes,
        vmem_limit_bytes=_VMEM_LIMIT,
    )


def _choose_row_tile(m: int, max_tile: int = 512) -> int:
    """Largest legal row tile <= max_tile (multiple of 8, divides m), else full m."""
    if m <= max_tile:
        return m
    for t in range(max_tile, 7, -1):
        if m % t == 0 and t % 8 == 0:
            return t
    return m


# --------------------------- linear (+bias, +ReLU) ---------------------------

def _linear_kernel(x_ref, w_ref, b_ref, o_ref, *, apply_relu: bool):
    acc = jnp.dot(x_ref[...], w_ref[...], preferred_element_type=jnp.float32)
    acc = acc + b_ref[...].astype(jnp.float32)
    if apply_relu:
        acc = jnp.maximum(acc, 0.0)
    o_ref[...] = acc.astype(o_ref.dtype)


def linear(x2d, w, b, apply_relu: bool = False):
    """x2d: [M, K]; w: [K, N]; b: [1, N]  ->  [M, N]  (y = x @ w + b, optional ReLU)."""
    m, k = x2d.shape
    k2, n = w.shape
    assert k == k2 and b.shape == (1, n)
    tm = _choose_row_tile(m)
    kernel = functools.partial(_linear_kernel, apply_relu=apply_relu)
    return pl.pallas_call(
        kernel,
        out_shape=jax.ShapeDtypeStruct((m, n), x2d.dtype),
        grid=(m // tm,),
        in_specs=[
            pl.BlockSpec((tm, k), lambda i: (i, 0)),
            pl.BlockSpec((k, n), lambda i: (0, 0)),   # constant block: DMA'd once
            pl.BlockSpec((1, n), lambda i: (0, 0)),
        ],
        out_specs=pl.BlockSpec((tm, n), lambda i: (i, 0)),
        compiler_params=_compiler_params(1),
    )(x2d, w, b)


# ------------------------ LayerNorm / residual+LayerNorm ---------------------

def _ln_core(xf, g_ref, b_ref, o_ref):
    mean = jnp.mean(xf, axis=-1, keepdims=True)
    cent = xf - mean
    var = jnp.mean(cent * cent, axis=-1, keepdims=True)
    inv = lax.rsqrt(var + _LN_EPS)
    out = cent * inv * g_ref[...].astype(jnp.float32) + b_ref[...].astype(jnp.float32)
    o_ref[...] = out.astype(o_ref.dtype)


def _ln_kernel(x_ref, g_ref, b_ref, o_ref):
    _ln_core(x_ref[...].astype(jnp.float32), g_ref, b_ref, o_ref)


def _add_ln_kernel(x_ref, y_ref, g_ref, b_ref, o_ref):
    xf = x_ref[...].astype(jnp.float32) + y_ref[...].astype(jnp.float32)
    _ln_core(xf, g_ref, b_ref, o_ref)


def layer_norm(x2d, gamma, beta):
    m, d = x2d.shape
    tm = _choose_row_tile(m)
    return pl.pallas_call(
        _ln_kernel,
        out_shape=jax.ShapeDtypeStruct((m, d), x2d.dtype),
        grid=(m // tm,),
        in_specs=[
            pl.BlockSpec((tm, d), lambda i: (i, 0)),
            pl.BlockSpec((1, d), lambda i: (0, 0)),
            pl.BlockSpec((1, d), lambda i: (0, 0)),
        ],
        out_specs=pl.BlockSpec((tm, d), lambda i: (i, 0)),
        compiler_params=_compiler_params(1),
    )(x2d, gamma, beta)


def add_layer_norm(x2d, y2d, gamma, beta):
    """Fused residual: LayerNorm(x + y)."""
    m, d = x2d.shape
    tm = _choose_row_tile(m)
    return pl.pallas_call(
        _add_ln_kernel,
        out_shape=jax.ShapeDtypeStruct((m, d), x2d.dtype),
        grid=(m // tm,),
        in_specs=[
            pl.BlockSpec((tm, d), lambda i: (i, 0)),
            pl.BlockSpec((tm, d), lambda i: (i, 0)),
            pl.BlockSpec((1, d), lambda i: (0, 0)),
            pl.BlockSpec((1, d), lambda i: (0, 0)),
        ],
        out_specs=pl.BlockSpec((tm, d), lambda i: (i, 0)),
        compiler_params=_compiler_params(1),
    )(x2d, y2d, gamma, beta)


# ------------------------------ attention core --------------------------------

def _mha_kernel(q_ref, k_ref, v_ref, o_ref, *, scale: float):
    # blocks: (1, H, S, Dh) -> per-batch, all heads at once
    q = q_ref[0].astype(jnp.float32) * scale          # (H, S, Dh)
    k = k_ref[0].astype(jnp.float32)                  # (H, S, Dh)
    v = v_ref[0]                                      # (H, S, Dh)
    s = jnp.einsum("hqd,hkd->hqk", q, k, preferred_element_type=jnp.float32)
    m = jnp.max(s, axis=-1, keepdims=True)
    p = jnp.exp(s - m)
    denom = jnp.sum(p, axis=-1, keepdims=True)
    p = p * pl.reciprocal(denom, approx=True)
    out = jnp.einsum("hqk,hkd->hqd", p.astype(v.dtype), v,
                     preferred_element_type=jnp.float32)
    o_ref[0] = out.astype(o_ref.dtype)


def multi_head_attention(q, k, v, scale: float):
    """q, k, v: [B, H, S, Dh] -> softmax(q k^T * scale) v, per (batch, head)."""
    b, h, s, dh = q.shape
    spec = pl.BlockSpec((1, h, s, dh), lambda i: (i, 0, 0, 0))
    kernel = functools.partial(_mha_kernel, scale=scale)
    return pl.pallas_call(
        kernel,
        out_shape=jax.ShapeDtypeStruct((b, h, s, dh), q.dtype),
        grid=(b,),
        in_specs=[spec, spec, spec],
        out_specs=spec,
        compiler_params=_compiler_params(1),
    )(q, k, v)


# ------------------------------ encoder forward --------------------------------

def _encoder_layer(x2d, p, B, S, H):
    D = x2d.shape[-1]
    Dh = D // H
    # self-attention (in_proj fused into one matmul: [D, 3D])
    qkv = linear(x2d, p["w_qkv"], p["b_qkv"])                   # [B*S, 3D]
    qkv = qkv.reshape(B, S, 3, H, Dh)
    q = qkv[:, :, 0].transpose(0, 2, 1, 3)                      # [B, H, S, Dh]
    k = qkv[:, :, 1].transpose(0, 2, 1, 3)
    v = qkv[:, :, 2].transpose(0, 2, 1, 3)
    attn = multi_head_attention(q, k, v, scale=1.0 / math.sqrt(Dh))
    attn2d = attn.transpose(0, 2, 1, 3).reshape(B * S, D)
    attn_out = linear(attn2d, p["w_o"], p["b_o"])
    x2d = add_layer_norm(x2d, attn_out, p["ln1_g"], p["ln1_b"])  # norm1(x + attn)
    # feed-forward (ReLU fused into first matmul)
    ff = linear(x2d, p["w_ff1"], p["b_ff1"], apply_relu=True)
    ff = linear(ff, p["w_ff2"], p["b_ff2"])
    x2d = add_layer_norm(x2d, ff, p["ln2_g"], p["ln2_b"])        # norm2(x + ff)
    return x2d


@functools.partial(jax.jit, static_argnames=("nhead",))
def encoder_forward(src, params, *, nhead):
    """src: [B, S, D].  Equivalent to permute -> TransformerEncoder -> permute."""
    B, S, D = src.shape
    x2d = src.reshape(B * S, D)
    for layer_params in params["layers"]:
        x2d = _encoder_layer(x2d, layer_params, B, S, nhead)
    x2d = layer_norm(x2d, params["ln_f_g"], params["ln_f_b"])    # final encoder norm
    return x2d.reshape(B, S, D)


# ------------------------------ params & reference --------------------------------

def init_params(key, d_model, nhead, dim_ff, num_layers, dtype=jnp.float32):
    def dense(k, fan_in, fan_out):
        return ((1.0 / math.sqrt(fan_in))
                * jax.random.normal(k, (fan_in, fan_out), jnp.float32)).astype(dtype)

    def bias(k, n):
        return (0.02 * jax.random.normal(k, (1, n), jnp.float32)).astype(dtype)

    layers = []
    for lk in jax.random.split(key, num_layers):
        k = jax.random.split(lk, 8)
        layers.append(dict(
            w_qkv=dense(k[0], d_model, 3 * d_model), b_qkv=bias(k[1], 3 * d_model),
            w_o=dense(k[2], d_model, d_model),       b_o=bias(k[3], d_model),
            w_ff1=dense(k[4], d_model, dim_ff),      b_ff1=bias(k[5], dim_ff),
            w_ff2=dense(k[6], dim_ff, d_model),      b_ff2=bias(k[7], d_model),
            ln1_g=jnp.ones((1, d_model), dtype), ln1_b=jnp.zeros((1, d_model), dtype),
            ln2_g=jnp.ones((1, d_model), dtype), ln2_b=jnp.zeros((1, d_model), dtype),
        ))
    return dict(layers=layers,
                ln_f_g=jnp.ones((1, d_model), dtype),
                ln_f_b=jnp.zeros((1, d_model), dtype))


def _ln_ref(x, g, b):
    mean = x.mean(-1, keepdims=True)
    var = ((x - mean) ** 2).mean(-1, keepdims=True)
    return (x - mean) / jnp.sqrt(var + _LN_EPS) * g + b


def _reference_forward(src, params, nhead):
    B, S, D = src.shape
    Dh = D // nhead
    x = src.reshape(B * S, D)
    for p in params["layers"]:
        qkv = (x @ p["w_qkv"] + p["b_qkv"]).reshape(B, S, 3, nhead, Dh)
        q = qkv[:, :, 0].transpose(0, 2, 1, 3)
        k = qkv[:, :, 1].transpose(0, 2, 1, 3)
        v = qkv[:, :, 2].transpose(0, 2, 1, 3)
        s = jnp.einsum("bhqd,bhkd->bhqk", q / math.sqrt(Dh), k)
        a = jax.nn.softmax(s, axis=-1)
        attn = jnp.einsum("bhqk,bhkd->bhqd", a, v).transpose(0, 2, 1, 3).reshape(B * S, D)
        attn = attn @ p["w_o"] + p["b_o"]
        x = _ln_ref(x + attn, p["ln1_g"], p["ln1_b"])
        ff = jnp.maximum(x @ p["w_ff1"] + p["b_ff1"], 0.0) @ p["w_ff2"] + p["b_ff2"]
        x = _ln_ref(x + ff, p["ln2_g"], p["ln2_b"])
    x = _ln_ref(x, params["ln_f_g"], params["ln_f_b"])
    return x.reshape(B, S, D)


if __name__ == "__main__":
    # Small shapes consistent with the module's forward.
    d_model, nhead, dim_feedforward, num_layers = 32, 4, 64, 2
    batch, seq = 2, 8

    key = jax.random.PRNGKey(0)
    kx, kp = jax.random.split(key)
    src = jax.random.normal(kx, (batch, seq, d_model), jnp.float32)
    params = init_params(kp, d_model, nhead, dim_feedforward, num_layers)

    out = encoder_forward(src, params, nhead=nhead)
    out = jax.block_until_ready(out)

    ref = _reference_forward(src, params, nhead)
    assert out.shape == src.shape and out.dtype == src.dtype
    assert bool(jnp.all(jnp.isfinite(out)))
    assert jnp.allclose(out, ref, atol=5e-2, rtol=5e-2), float(jnp.max(jnp.abs(out - ref)))

    # TODO(synk): nn.Dropout layers inside TransformerEncoderLayer are identity at
    # inference and are intentionally omitted (no training-mode dropout kernel).
    print("KERNEL_OK")
</pallas_src>

<mosaic_0001>
module attributes {stable_mosaic.version = 11 : i64} {
  func.func @_linear_kernel(%arg0: i32, %arg1: memref<16x32xf32, #tpu.memory_space<vmem>>, %arg2: memref<32x96xf32, #tpu.memory_space<vmem>>, %arg3: memref<1x96xf32, #tpu.memory_space<vmem>>, %arg4: memref<16x96xf32, #tpu.memory_space<vmem>>) attributes {dimension_semantics = [#tpu.dimension_semantics<parallel>], iteration_bounds = array<i64: 1>, scalar_prefetch = 0 : i64, scratch_operands = 0 : i64, tpu.core_type = #tpu.core_type<tc>, window_params = [{transform_indices = @transform_0, window_bounds = array<i64: 16, 32>}, {pipeline_mode = #tpu.pipeline_mode<synchronous>, transform_indices = @transform_1, window_bounds = array<i64: 32, 96>}, {pipeline_mode = #tpu.pipeline_mode<synchronous>, transform_indices = @transform_2, window_bounds = array<i64: 1, 96>}, {transform_indices = @transform_3, window_bounds = array<i64: 16, 96>}]} {
    %c0 = arith.constant 0 : index
    %c0_0 = arith.constant 0 : index
    %0 = vector.load %arg1[%c0, %c0_0] : memref<16x32xf32, #tpu.memory_space<vmem>>, vector<16x32xf32>
    %c0_1 = arith.constant 0 : index
    %c0_2 = arith.constant 0 : index
    %1 = vector.load %arg2[%c0_1, %c0_2] : memref<32x96xf32, #tpu.memory_space<vmem>>, vector<32x96xf32>
    %cst = arith.constant dense<0.000000e+00> : vector<16x96xf32>
    %2 = tpu.matmul %0, %1, %cst {dimension_numbers = #tpu.dot_dimension_numbers<[1], [0], [0], [1], [0, 0, 1, 1], [], []>} : vector<16x32xf32>, vector<32x96xf32>, vector<16x96xf32> -> vector<16x96xf32>
    %c0_3 = arith.constant 0 : index
    %c0_4 = arith.constant 0 : index
    %3 = vector.load %arg3[%c0_3, %c0_4] : memref<1x96xf32, #tpu.memory_space<vmem>>, vector<1x96xf32>
    %4 = vector.broadcast %3 : vector<1x96xf32> to vector<16x96xf32>
    %5 = arith.addf %2, %4 : vector<16x96xf32>
    %c0_5 = arith.constant 0 : index
    %c0_6 = arith.constant 0 : index
    %6 = vector.load %arg4[%c0_5, %c0_6] : memref<16x96xf32, #tpu.memory_space<vmem>>, vector<16x96xf32>
    tpu.vector_store %arg4[%c0_5, %c0_6], %5 {strides = array<i32>} : memref<16x96xf32, #tpu.memory_space<vmem>>, vector<16x96xf32>,
    return
  }
  func.func @transform_0(%arg0: i32) -> (i32, i32) {
    %c0_i32 = arith.constant 0 : i32
    %c0_i32_0 = arith.constant 0 : i32
    return %arg0, %c0_i32 : i32, i32
  }
  func.func @transform_1(%arg0: i32) -> (i32, i32) {
    %c0_i32 = arith.constant 0 : i32
    %c0_i32_0 = arith.constant 0 : i32
    %c0_i32_1 = arith.constant 0 : i32
    return %c0_i32, %c0_i32_0 : i32, i32
  }
  func.func @transform_2(%arg0: i32) -> (i32, i32) {
    %c0_i32 = arith.constant 0 : i32
    %c0_i32_0 = arith.constant 0 : i32
    %c0_i32_1 = arith.constant 0 : i32
    return %c0_i32, %c0_i32_0 : i32, i32
  }
  func.func @transform_3(%arg0: i32) -> (i32, i32) {
    %c0_i32 = arith.constant 0 : i32
    %c0_i32_0 = arith.constant 0 : i32
    return %arg0, %c0_i32 : i32, i32
  }
}

module attributes {stable_mosaic.version = 11 : i64} {
  func.func @_mha_kernel(%arg0: i32, %arg1: memref<1x4x8x8xf32, #tpu.memory_space<vmem>>, %arg2: memref<1x4x8x8xf32, #tpu.memory_space<vmem>>, %arg3: memref<1x4x8x8xf32, #tpu.memory_space<vmem>>, %arg4: memref<1x4x8x8xf32, #tpu.memory_space<vmem>>) attributes {dimension_semantics = [#tpu.dimension_semantics<parallel>], iteration_bounds = array<i64: 2>, scalar_prefetch = 0 : i64, scratch_operands = 0 : i64, tpu.core_type = #tpu.core_type<tc>, window_params = [{transform_indices = @transform_0, window_bounds = array<i64: 1, 4, 8, 8>}, {transform_indices = @transform_1, window_bounds = array<i64: 1, 4, 8, 8>}, {transform_indices = @transform_2, window_bounds = array<i64: 1, 4, 8, 8>}, {transform_indices = @transform_3, window_bounds = array<i64: 1, 4, 8, 8>}]} {
    %c0 = arith.constant 0 : index
    %c0_0 = arith.constant 0 : index
    %c0_1 = arith.constant 0 : index
    %c0_2 = arith.constant 0 : index
    %0 = vector.load %arg1[%c0, %c0_0, %c0_1, %c0_2] : memref<1x4x8x8xf32, #tpu.memory_space<vmem>>, vector<1x4x8x8xf32>
    %1 = vector.shape_cast %0 : vector<1x4x8x8xf32> to vector<4x8x8xf32>
    %cst = arith.constant 0.353553385 : f32
    %2 = vector.broadcast %cst : f32 to vector<4x8x8xf32>
    %3 = arith.mulf %1, %2 : vector<4x8x8xf32>
    %c0_3 = arith.constant 0 : index
    %c0_4 = arith.constant 0 : index
    %c0_5 = arith.constant 0 : index
    %c0_6 = arith.constant 0 : index
    %4 = vector.load %arg2[%c0_3, %c0_4, %c0_5, %c0_6] : memref<1x4x8x8xf32, #tpu.memory_space<vmem>>, vector<1x4x8x8xf32>
    %5 = vector.shape_cast %4 : vector<1x4x8x8xf32> to vector<4x8x8xf32>
    %c0_7 = arith.constant 0 : index
    %c0_8 = arith.constant 0 : index
    %c0_9 = arith.constant 0 : index
    %c0_10 = arith.constant 0 : index
    %6 = vector.load %arg3[%c0_7, %c0_8, %c0_9, %c0_10] : memref<1x4x8x8xf32, #tpu.memory_space<vmem>>, vector<1x4x8x8xf32>
    %7 = vector.shape_cast %6 : vector<1x4x8x8xf32> to vector<4x8x8xf32>
    "tpu.trace_start"() <{level = 10 : i32, message = "hqd,hkd->hqk"}> : () -> ()
    %cst_11 = arith.constant dense<0.000000e+00> : vector<4x8x8xf32>
    %8 = tpu.matmul %3, %5, %cst_11 {dimension_numbers = #tpu.dot_dimension_numbers<[2], [2], [1], [1], [0, 0, 0, 1, 1, 1], [0], [0]>} : vector<4x8x8xf32>, vector<4x8x8xf32>, vector<4x8x8xf32> -> vector<4x8x8xf32>
    "tpu.trace_stop"() : () -> ()
    %cst_12 = arith.constant dense<0xFF800000> : vector<4x8xf32>
    %9 = vector.multi_reduction <maximumf>, %8, %cst_12 [2] : vector<4x8x8xf32> to vector<4x8xf32>
    %10 = vector.shape_cast %9 : vector<4x8xf32> to vector<4x8x1xf32>
    %11 = vector.broadcast %10 : vector<4x8x1xf32> to vector<4x8x8xf32>
    %12 = arith.subf %8, %11 : vector<4x8x8xf32>
    %13 = math.exp %12 : vector<4x8x8xf32>
    %cst_13 = arith.constant dense<0.000000e+00> : vector<4x8xf32>
    %14 = vector.multi_reduction <add>, %13, %cst_13 [2] : vector<4x8x8xf32> to vector<4x8xf32>
    %15 = vector.shape_cast %14 : vector<4x8xf32> to vector<4x8x1xf32>
    %16 = tpu.reciprocal %15 {approx = true} : vector<4x8x1xf32> -> vector<4x8x1xf32>
    %17 = vector.broadcast %16 : vector<4x8x1xf32> to vector<4x8x8xf32>
    %18 = arith.mulf %13, %17 : vector<4x8x8xf32>
    "tpu.trace_start"() <{level = 10 : i32, message = "hqk,hkd->hqd"}> : () -> ()
    %cst_14 = arith.constant dense<0.000000e+00> : vector<4x8x8xf32>
    %19 = tpu.matmul %18, %7, %cst_14 {dimension_numbers = #tpu.dot_dimension_numbers<[2], [1], [1], [2], [0, 0, 0, 1, 1, 2], [0], [0]>} : vector<4x8x8xf32>, vector<4x8x8xf32>, vector<4x8x8xf32> -> vector<4x8x8xf32>
    "tpu.trace_stop"() : () -> ()
    %c0_15 = arith.constant 0 : index
    %c0_16 = arith.constant 0 : index
    %c0_17 = arith.constant 0 : index
    %c0_18 = arith.constant 0 : index
    %20 = vector.load %arg4[%c0_15, %c0_16, %c0_17, %c0_18] : memref<1x4x8x8xf32, #tpu.memory_space<vmem>>, vector<1x4x8x8xf32>
    %21 = vector.shape_cast %20 : vector<1x4x8x8xf32> to vector<4x8x8xf32>
    %22 = vector.shape_cast %19 : vector<4x8x8xf32> to vector<1x4x8x8xf32>
    tpu.vector_store %arg4[%c0_15, %c0_16, %c0_17, %c0_18], %22 {strides = array<i32>} : memref<1x4x8x8xf32, #tpu.memory_space<vmem>>, vector<1x4x8x8xf32>,
    return
  }
  func.func @transform_0(%arg0: i32) -> (i32, i32, i32, i32) {
    %c0_i32 = arith.constant 0 : i32
    %c0_i32_0 = arith.constant 0 : i32
    %c0_i32_1 = arith.constant 0 : i32
    %c0_i32_2 = arith.constant 0 : i32
    return %arg0, %c0_i32, %c0_i32_0, %c0_i32_1 : i32, i32, i32, i32
  }
  func.func @transform_1(%arg0: i32) -> (i32, i32, i32, i32) {
    %c0_i32 = arith.constant 0 : i32
    %c0_i32_0 = arith.constant 0 : i32
    %c0_i32_1 = arith.constant 0 : i32
    %c0_i32_2 = arith.constant 0 : i32
    return %arg0, %c0_i32, %c0_i32_0, %c0_i32_1 : i32, i32, i32, i32
  }
  func.func @transform_2(%arg0: i32) -> (i32, i32, i32, i32) {
    %c0_i32 = arith.constant 0 : i32
    %c0_i32_0 = arith.constant 0 : i32
    %c0_i32_1 = arith.constant 0 : i32
    %c0_i32_2 = arith.constant 0 : i32
    return %arg0, %c0_i32, %c0_i32_0, %c0_i32_1 : i32, i32, i32, i32
  }
  func.func @transform_3(%arg0: i32) -> (i32, i32, i32, i32) {
    %c0_i32 = arith.constant 0 : i32
    %c0_i32_0 = arith.constant 0 : i32
    %c0_i32_1 = arith.constant 0 : i32
    %c0_i32_2 = arith.constant 0 : i32
    return %arg0, %c0_i32, %c0_i32_0, %c0_i32_1 : i32, i32, i32, i32
  }
}

module attributes {stable_mosaic.version = 11 : i64} {
  func.func @_add_ln_kernel(%arg0: i32, %arg1: memref<16x32xf32, #tpu.memory_space<vmem>>, %arg2: memref<16x32xf32, #tpu.memory_space<vmem>>, %arg3: memref<1x32xf32, #tpu.memory_space<vmem>>, %arg4: memref<1x32xf32, #tpu.memory_space<vmem>>, %arg5: memref<16x32xf32, #tpu.memory_space<vmem>>) attributes {dimension_semantics = [#tpu.dimension_semantics<parallel>], iteration_bounds = array<i64: 1>, scalar_prefetch = 0 : i64, scratch_operands = 0 : i64, tpu.core_type = #tpu.core_type<tc>, window_params = [{transform_indices = @transform_0, window_bounds = array<i64: 16, 32>}, {transform_indices = @transform_1, window_bounds = array<i64: 16, 32>}, {pipeline_mode = #tpu.pipeline_mode<synchronous>, transform_indices = @transform_2, window_bounds = array<i64: 1, 32>}, {pipeline_mode = #tpu.pipeline_mode<synchronous>, transform_indices = @transform_3, window_bounds = array<i64: 1, 32>}, {transform_indices = @transform_4, window_bounds = array<i64: 16, 32>}]} {
    %c0 = arith.constant 0 : index
    %c0_0 = arith.constant 0 : index
    %0 = vector.load %arg1[%c0, %c0_0] : memref<16x32xf32, #tpu.memory_space<vmem>>, vector<16x32xf32>
    %c0_1 = arith.constant 0 : index
    %c0_2 = arith.constant 0 : index
    %1 = vector.load %arg2[%c0_1, %c0_2] : memref<16x32xf32, #tpu.memory_space<vmem>>, vector<16x32xf32>
    %2 = arith.addf %0, %1 : vector<16x32xf32>
    %cst = arith.constant dense<0.000000e+00> : vector<16xf32>
    %3 = vector.multi_reduction <add>, %2, %cst [1] : vector<16x32xf32> to vector<16xf32>
    %4 = vector.shape_cast %3 : vector<16xf32> to vector<16x1xf32>
    %cst_3 = arith.constant 3.200000e+01 : f32
    %5 = vector.broadcast %cst_3 : f32 to vector<16x1xf32>
    %6 = arith.divf %4, %5 : vector<16x1xf32>
    %7 = vector.broadcast %6 : vector<16x1xf32> to vector<16x32xf32>
    %8 = arith.subf %2, %7 : vector<16x32xf32>
    %9 = arith.mulf %8, %8 : vector<16x32xf32>
    %cst_4 = arith.constant dense<0.000000e+00> : vector<16xf32>
    %10 = vector.multi_reduction <add>, %9, %cst_4 [1] : vector<16x32xf32> to vector<16xf32>
    %11 = vector.shape_cast %10 : vector<16xf32> to vector<16x1xf32>
    %cst_5 = arith.constant 3.200000e+01 : f32
    %12 = vector.broadcast %cst_5 : f32 to vector<16x1xf32>
    %13 = arith.divf %11, %12 : vector<16x1xf32>
    %cst_6 = arith.constant 9.99999974E-6 : f32
    %14 = vector.broadcast %cst_6 : f32 to vector<16x1xf32>
    %15 = arith.addf %13, %14 : vector<16x1xf32>
    %16 = math.rsqrt %15 : vector<16x1xf32>
    %17 = vector.broadcast %16 : vector<16x1xf32> to vector<16x32xf32>
    %18 = arith.mulf %8, %17 : vector<16x32xf32>
    %c0_7 = arith.constant 0 : index
    %c0_8 = arith.constant 0 : index
    %19 = vector.load %arg3[%c0_7, %c0_8] : memref<1x32xf32, #tpu.memory_space<vmem>>, vector<1x32xf32>
    %20 = vector.broadcast %19 : vector<1x32xf32> to vector<16x32xf32>
    %21 = arith.mulf %18, %20 : vector<16x32xf32>
    %c0_9 = arith.constant 0 : index
    %c0_10 = arith.constant 0 : index
    %22 = vector.load %arg4[%c0_9, %c0_10] : memref<1x32xf32, #tpu.memory_space<vmem>>, vector<1x32xf32>
    %23 = vector.broadcast %22 : vector<1x32xf32> to vector<16x32xf32>
    %24 = arith.addf %21, %23 : vector<16x32xf32>
    %c0_11 = arith.constant 0 : index
    %c0_12 = arith.constant 0 : index
    %25 = vector.load %arg5[%c0_11, %c0_12] : memref<16x32xf32, #tpu.memory_space<vmem>>, vector<16x32xf32>
    tpu.vector_store %arg5[%c0_11, %c0_12], %24 {strides = array<i32>} : memref<16x32xf32, #tpu.memory_space<vmem>>, vector<16x32xf32>,
    return
  }
  func.func @transform_0(%arg0: i32) -> (i32, i32) {
    %c0_i32 = arith.constant 0 : i32
    %c0_i32_0 = arith.constant 0 : i32
    return %arg0, %c0_i32 : i32, i32
  }
  func.func @transform_1(%arg0: i32) -> (i32, i32) {
    %c0_i32 = arith.constant 0 : i32
    %c0_i32_0 = arith.constant 0 : i32
    return %arg0, %c0_i32 : i32, i32
  }
  func.func @transform_2(%arg0: i32) -> (i32, i32) {
    %c0_i32 = arith.constant 0 : i32
    %c0_i32_0 = arith.constant 0 : i32
    %c0_i32_1 = arith.constant 0 : i32
    return %c0_i32, %c0_i32_0 : i32, i32
  }
  func.func @transform_3(%arg0: i32) -> (i32, i32) {
    %c0_i32 = arith.constant 0 : i32
    %c0_i32_0 = arith.constant 0 : i32
    %c0_i32_1 = arith.constant 0 : i32
    return %c0_i32, %c0_i32_0 : i32, i32
  }
  func.func @transform_4(%arg0: i32) -> (i32, i32) {
    %c0_i32 = arith.constant 0 : i32
    %c0_i32_0 = arith.constant 0 : i32
    return %arg0, %c0_i32 : i32, i32
  }
}

module attributes {stable_mosaic.version = 11 : i64} {
  func.func @_linear_kernel(%arg0: i32, %arg1: memref<16x32xf32, #tpu.memory_space<vmem>>, %arg2: memref<32x32xf32, #tpu.memory_space<vmem>>, %arg3: memref<1x32xf32, #tpu.memory_space<vmem>>, %arg4: memref<16x32xf32, #tpu.memory_space<vmem>>) attributes {dimension_semantics = [#tpu.dimension_semantics<parallel>], iteration_bounds = array<i64: 1>, scalar_prefetch = 0 : i64, scratch_operands = 0 : i64, tpu.core_type = #tpu.core_type<tc>, window_params = [{transform_indices = @transform_0, window_bounds = array<i64: 16, 32>}, {pipeline_mode = #tpu.pipeline_mode<synchronous>, transform_indices = @transform_1, window_bounds = array<i64: 32, 32>}, {pipeline_mode = #tpu.pipeline_mode<synchronous>, transform_indices = @transform_2, window_bounds = array<i64: 1, 32>}, {transform_indices = @transform_3, window_bounds = array<i64: 16, 32>}]} {
    %c0 = arith.constant 0 : index
    %c0_0 = arith.constant 0 : index
    %0 = vector.load %arg1[%c0, %c0_0] : memref<16x32xf32, #tpu.memory_space<vmem>>, vector<16x32xf32>
    %c0_1 = arith.constant 0 : index
    %c0_2 = arith.constant 0 : index
    %1 = vector.load %arg2[%c0_1, %c0_2] : memref<32x32xf32, #tpu.memory_space<vmem>>, vector<32x32xf32>
    %cst = arith.constant dense<0.000000e+00> : vector<16x32xf32>
    %2 = tpu.matmul %0, %1, %cst {dimension_numbers = #tpu.dot_dimension_numbers<[1], [0], [0], [1], [0, 0, 1, 1], [], []>} : vector<16x32xf32>, vector<32x32xf32>, vector<16x32xf32> -> vector<16x32xf32>
    %c0_3 = arith.constant 0 : index
    %c0_4 = arith.constant 0 : index
    %3 = vector.load %arg3[%c0_3, %c0_4] : memref<1x32xf32, #tpu.memory_space<vmem>>, vector<1x32xf32>
    %4 = vector.broadcast %3 : vector<1x32xf32> to vector<16x32xf32>
    %5 = arith.addf %2, %4 : vector<16x32xf32>
    %c0_5 = arith.constant 0 : index
    %c0_6 = arith.constant 0 : index
    %6 = vector.load %arg4[%c0_5, %c0_6] : memref<16x32xf32, #tpu.memory_space<vmem>>, vector<16x32xf32>
    tpu.vector_store %arg4[%c0_5, %c0_6], %5 {strides = array<i32>} : memref<16x32xf32, #tpu.memory_space<vmem>>, vector<16x32xf32>,
    return
  }
  func.func @transform_0(%arg0: i32) -> (i32, i32) {
    %c0_i32 = arith.constant 0 : i32
    %c0_i32_0 = arith.constant 0 : i32
    return %arg0, %c0_i32 : i32, i32
  }
  func.func @transform_1(%arg0: i32) -> (i32, i32) {
    %c0_i32 = arith.constant 0 : i32
    %c0_i32_0 = arith.constant 0 : i32
    %c0_i32_1 = arith.constant 0 : i32
    return %c0_i32, %c0_i32_0 : i32, i32
  }
  func.func @transform_2(%arg0: i32) -> (i32, i32) {
    %c0_i32 = arith.constant 0 : i32
    %c0_i32_0 = arith.constant 0 : i32
    %c0_i32_1 = arith.constant 0 : i32
    return %c0_i32, %c0_i32_0 : i32, i32
  }
  func.func @transform_3(%arg0: i32) -> (i32, i32) {
    %c0_i32 = arith.constant 0 : i32
    %c0_i32_0 = arith.constant 0 : i32
    return %arg0, %c0_i32 : i32, i32
  }
}

module attributes {stable_mosaic.version = 11 : i64} {
  func.func @_linear_kernel(%arg0: i32, %arg1: memref<16x32xf32, #tpu.memory_space<vmem>>, %arg2: memref<32x64xf32, #tpu.memory_space<vmem>>, %arg3: memref<1x64xf32, #tpu.memory_space<vmem>>, %arg4: memref<16x64xf32, #tpu.memory_space<vmem>>) attributes {dimension_semantics = [#tpu.dimension_semantics<parallel>], iteration_bounds = array<i64: 1>, scalar_prefetch = 0 : i64, scratch_operands = 0 : i64, tpu.core_type = #tpu.core_type<tc>, window_params = [{transform_indices = @transform_0, window_bounds = array<i64: 16, 32>}, {pipeline_mode = #tpu.pipeline_mode<synchronous>, transform_indices = @transform_1, window_bounds = array<i64: 32, 64>}, {pipeline_mode = #tpu.pipeline_mode<synchronous>, transform_indices = @transform_2, window_bounds = array<i64: 1, 64>}, {transform_indices = @transform_3, window_bounds = array<i64: 16, 64>}]} {
    %c0 = arith.constant 0 : index
    %c0_0 = arith.constant 0 : index
    %0 = vector.load %arg1[%c0, %c0_0] : memref<16x32xf32, #tpu.memory_space<vmem>>, vector<16x32xf32>
    %c0_1 = arith.constant 0 : index
    %c0_2 = arith.constant 0 : index
    %1 = vector.load %arg2[%c0_1, %c0_2] : memref<32x64xf32, #tpu.memory_space<vmem>>, vector<32x64xf32>
    %cst = arith.constant dense<0.000000e+00> : vector<16x64xf32>
    %2 = tpu.matmul %0, %1, %cst {dimension_numbers = #tpu.dot_dimension_numbers<[1], [0], [0], [1], [0, 0, 1, 1], [], []>} : vector<16x32xf32>, vector<32x64xf32>, vector<16x64xf32> -> vector<16x64xf32>
    %c0_3 = arith.constant 0 : index
    %c0_4 = arith.constant 0 : index
    %3 = vector.load %arg3[%c0_3, %c0_4] : memref<1x64xf32, #tpu.memory_space<vmem>>, vector<1x64xf32>
    %4 = vector.broadcast %3 : vector<1x64xf32> to vector<16x64xf32>
    %5 = arith.addf %2, %4 : vector<16x64xf32>
    %cst_5 = arith.constant 0.000000e+00 : f32
    %6 = vector.broadcast %cst_5 : f32 to vector<16x64xf32>
    %7 = arith.maximumf %5, %6 : vector<16x64xf32>
    %c0_6 = arith.constant 0 : index
    %c0_7 = arith.constant 0 : index
    %8 = vector.load %arg4[%c0_6, %c0_7] : memref<16x64xf32, #tpu.memory_space<vmem>>, vector<16x64xf32>
    tpu.vector_store %arg4[%c0_6, %c0_7], %7 {strides = array<i32>} : memref<16x64xf32, #tpu.memory_space<vmem>>, vector<16x64xf32>,
    return
  }
  func.func @transform_0(%arg0: i32) -> (i32, i32) {
    %c0_i32 = arith.constant 0 : i32
    %c0_i32_0 = arith.constant 0 : i32
    return %arg0, %c0_i32 : i32, i32
  }
  func.func @transform_1(%arg0: i32) -> (i32, i32) {
    %c0_i32 = arith.constant 0 : i32
    %c0_i32_0 = arith.constant 0 : i32
    %c0_i32_1 = arith.constant 0 : i32
    return %c0_i32, %c0_i32_0 : i32, i32
  }
  func.func @transform_2(%arg0: i32) -> (i32, i32) {
    %c0_i32 = arith.constant 0 : i32
    %c0_i32_0 = arith.constant 0 : i32
    %c0_i32_1 = arith.constant 0 : i32
    return %c0_i32, %c0_i32_0 : i32, i32
  }
  func.func @transform_3(%arg0: i32) -> (i32, i32) {
    %c0_i32 = arith.constant 0 : i32
    %c0_i32_0 = arith.constant 0 : i32
    return %arg0, %c0_i32 : i32, i32
  }
}

module attributes {stable_mosaic.version = 11 : i64} {
  func.func @_linear_kernel(%arg0: i32, %arg1: memref<16x64xf32, #tpu.memory_space<vmem>>, %arg2: memref<64x32xf32, #tpu.memory_space<vmem>>, %arg3: memref<1x32xf32, #tpu.memory_space<vmem>>, %arg4: memref<16x32xf32, #tpu.memory_space<vmem>>) attributes {dimension_semantics = [#tpu.dimension_semantics<parallel>], iteration_bounds = array<i64: 1>, scalar_prefetch = 0 : i64, scratch_operands = 0 : i64, tpu.core_type = #tpu.core_type<tc>, window_params = [{transform_indices = @transform_0, window_bounds = array<i64: 16, 64>}, {pipeline_mode = #tpu.pipeline_mode<synchronous>, transform_indices = @transform_1, window_bounds = array<i64: 64, 32>}, {pipeline_mode = #tpu.pipeline_mode<synchronous>, transform_indices = @transform_2, window_bounds = array<i64: 1, 32>}, {transform_indices = @transform_3, window_bounds = array<i64: 16, 32>}]} {
    %c0 = arith.constant 0 : index
    %c0_0 = arith.constant 0 : index
    %0 = vector.load %arg1[%c0, %c0_0] : memref<16x64xf32, #tpu.memory_space<vmem>>, vector<16x64xf32>
    %c0_1 = arith.constant 0 : index
    %c0_2 = arith.constant 0 : index
    %1 = vector.load %arg2[%c0_1, %c0_2] : memref<64x32xf32, #tpu.memory_space<vmem>>, vector<64x32xf32>
    %cst = arith.constant dense<0.000000e+00> : vector<16x32xf32>
    %2 = tpu.matmul %0, %1, %cst {dimension_numbers = #tpu.dot_dimension_numbers<[1], [0], [0], [1], [0, 0, 1, 1], [], []>} : vector<16x64xf32>, vector<64x32xf32>, vector<16x32xf32> -> vector<16x32xf32>
    %c0_3 = arith.constant 0 : index
    %c0_4 = arith.constant 0 : index
    %3 = vector.load %arg3[%c0_3, %c0_4] : memref<1x32xf32, #tpu.memory_space<vmem>>, vector<1x32xf32>
    %4 = vector.broadcast %3 : vector<1x32xf32> to vector<16x32xf32>
    %5 = arith.addf %2, %4 : vector<16x32xf32>
    %c0_5 = arith.constant 0 : index
    %c0_6 = arith.constant 0 : index
    %6 = vector.load %arg4[%c0_5, %c0_6] : memref<16x32xf32, #tpu.memory_space<vmem>>, vector<16x32xf32>
    tpu.vector_store %arg4[%c0_5, %c0_6], %5 {strides = array<i32>} : memref<16x32xf32, #tpu.memory_space<vmem>>, vector<16x32xf32>,
    return
  }
  func.func @transform_0(%arg0: i32) -> (i32, i32) {
    %c0_i32 = arith.constant 0 : i32
    %c0_i32_0 = arith.constant 0 : i32
    return %arg0, %c0_i32 : i32, i32
  }
  func.func @transform_1(%arg0: i32) -> (i32, i32) {
    %c0_i32 = arith.constant 0 : i32
    %c0_i32_0 = arith.constant 0 : i32
    %c0_i32_1 = arith.constant 0 : i32
    return %c0_i32, %c0_i32_0 : i32, i32
  }
  func.func @transform_2(%arg0: i32) -> (i32, i32) {
    %c0_i32 = arith.constant 0 : i32
    %c0_i32_0 = arith.constant 0 : i32
    %c0_i32_1 = arith.constant 0 : i32
    return %c0_i32, %c0_i32_0 : i32, i32
  }
  func.func @transform_3(%arg0: i32) -> (i32, i32) {
    %c0_i32 = arith.constant 0 : i32
    %c0_i32_0 = arith.constant 0 : i32
    return %arg0, %c0_i32 : i32, i32
  }
}

module attributes {stable_mosaic.version = 11 : i64} {
  func.func @_ln_kernel(%arg0: i32, %arg1: memref<16x32xf32, #tpu.memory_space<vmem>>, %arg2: memref<1x32xf32, #tpu.memory_space<vmem>>, %arg3: memref<1x32xf32, #tpu.memory_space<vmem>>, %arg4: memref<16x32xf32, #tpu.memory_space<vmem>>) attributes {dimension_semantics = [#tpu.dimension_semantics<parallel>], iteration_bounds = array<i64: 1>, scalar_prefetch = 0 : i64, scratch_operands = 0 : i64, tpu.core_type = #tpu.core_type<tc>, window_params = [{transform_indices = @transform_0, window_bounds = array<i64: 16, 32>}, {pipeline_mode = #tpu.pipeline_mode<synchronous>, transform_indices = @transform_1, window_bounds = array<i64: 1, 32>}, {pipeline_mode = #tpu.pipeline_mode<synchronous>, transform_indices = @transform_2, window_bounds = array<i64: 1, 32>}, {transform_indices = @transform_3, window_bounds = array<i64: 16, 32>}]} {
    %c0 = arith.constant 0 : index
    %c0_0 = arith.constant 0 : index
    %0 = vector.load %arg1[%c0, %c0_0] : memref<16x32xf32, #tpu.memory_space<vmem>>, vector<16x32xf32>
    %cst = arith.constant dense<0.000000e+00> : vector<16xf32>
    %1 = vector.multi_reduction <add>, %0, %cst [1] : vector<16x32xf32> to vector<16xf32>
    %2 = vector.shape_cast %1 : vector<16xf32> to vector<16x1xf32>
    %cst_1 = arith.constant 3.200000e+01 : f32
    %3 = vector.broadcast %cst_1 : f32 to vector<16x1xf32>
    %4 = arith.divf %2, %3 : vector<16x1xf32>
    %5 = vector.broadcast %4 : vector<16x1xf32> to vector<16x32xf32>
    %6 = arith.subf %0, %5 : vector<16x32xf32>
    %7 = arith.mulf %6, %6 : vector<16x32xf32>
    %cst_2 = arith.constant dense<0.000000e+00> : vector<16xf32>
    %8 = vector.multi_reduction <add>, %7, %cst_2 [1] : vector<16x32xf32> to vector<16xf32>
    %9 = vector.shape_cast %8 : vector<16xf32> to vector<16x1xf32>
    %cst_3 = arith.constant 3.200000e+01 : f32
    %10 = vector.broadcast %cst_3 : f32 to vector<16x1xf32>
    %11 = arith.divf %9, %10 : vector<16x1xf32>
    %cst_4 = arith.constant 9.99999974E-6 : f32
    %12 = vector.broadcast %cst_4 : f32 to vector<16x1xf32>
    %13 = arith.addf %11, %12 : vector<16x1xf32>
    %14 = math.rsqrt %13 : vector<16x1xf32>
    %15 = vector.broadcast %14 : vector<16x1xf32> to vector<16x32xf32>
    %16 = arith.mulf %6, %15 : vector<16x32xf32>
    %c0_5 = arith.constant 0 : index
    %c0_6 = arith.constant 0 : index
    %17 = vector.load %arg2[%c0_5, %c0_6] : memref<1x32xf32, #tpu.memory_space<vmem>>, vector<1x32xf32>
    %18 = vector.broadcast %17 : vector<1x32xf32> to vector<16x32xf32>
    %19 = arith.mulf %16, %18 : vector<16x32xf32>
    %c0_7 = arith.constant 0 : index
    %c0_8 = arith.constant 0 : index
    %20 = vector.load %arg3[%c0_7, %c0_8] : memref<1x32xf32, #tpu.memory_space<vmem>>, vector<1x32xf32>
    %21 = vector.broadcast %20 : vector<1x32xf32> to vector<16x32xf32>
    %22 = arith.addf %19, %21 : vector<16x32xf32>
    %c0_9 = arith.constant 0 : index
    %c0_10 = arith.constant 0 : index
    %23 = vector.load %arg4[%c0_9, %c0_10] : memref<16x32xf32, #tpu.memory_space<vmem>>, vector<16x32xf32>
    tpu.vector_store %arg4[%c0_9, %c0_10], %22 {strides = array<i32>} : memref<16x32xf32, #tpu.memory_space<vmem>>, vector<16x32xf32>,
    return
  }
  func.func @transform_0(%arg0: i32) -> (i32, i32) {
    %c0_i32 = arith.constant 0 : i32
    %c0_i32_0 = arith.constant 0 : i32
    return %arg0, %c0_i32 : i32, i32
  }
  func.func @transform_1(%arg0: i32) -> (i32, i32) {
    %c0_i32 = arith.constant 0 : i32
    %c0_i32_0 = arith.constant 0 : i32
    %c0_i32_1 = arith.constant 0 : i32
    return %c0_i32, %c0_i32_0 : i32, i32
  }
  func.func @transform_2(%arg0: i32) -> (i32, i32) {
    %c0_i32 = arith.constant 0 : i32
    %c0_i32_0 = arith.constant 0 : i32
    %c0_i32_1 = arith.constant 0 : i32
    return %c0_i32, %c0_i32_0 : i32, i32
  }
  func.func @transform_3(%arg0: i32) -> (i32, i32) {
    %c0_i32 = arith.constant 0 : i32
    %c0_i32_0 = arith.constant 0 : i32
    return %arg0, %c0_i32 : i32, i32
  }
}

</mosaic_0001>

<llo_original>
// kernel: encoder_forward.15
$region0: #{encoder_forward.15}
  #allocation0 [shape = 'u32[]', space=smem, size = 0x4, offset = 0x4, fixed_abs, tag = 'smem constant byte address 0x4 - core index']
  #allocation1 [shape = 'u32[144,128]{1,0:T(1,128)}', space=vmem, size = 0x12000, scoped, tag = 'internal scratch']
  %s0 = inlined_call_operand.vmem [shape: f32[16,32], index: 0, kind: input, shape index: {}]
  %s1 = inlined_call_operand.vmem [shape: f32[32,96], index: 1, kind: input, shape index: {}]
  %s2 = inlined_call_operand.vmem [shape: f32[1,96], index: 2, kind: input, shape index: {}]
  %s3 = inlined_call_operand.vmem [shape: f32[16,96], index: 3, kind: output, shape index: {}]
  %s4 = sld [smem:[#allocation0]]
  $region22: #{encoder_forward.15} parent=0
    _
  %s6 = ssub.s32 1, %s4
  %s7 = scalar_select 0, %s6, %s4
  // Predicated region
  $region2: #{encoder_forward.15} parent=0 // pred_check
    _
  $region3: #{encoder_forward.15} parent=0 // pred_check_branch
    %9 = sbr.rel (0) target = $region5
  $region4: #{encoder_forward.15} parent=0 // pred_region
    _
  $region5: #{encoder_forward.15} parent=0 // pred_fallthru
    _
  // Predicated region
  $region6: #{encoder_forward.15} parent=0 // pred_check
    _
  $region7: #{encoder_forward.15} parent=0 // pred_check_branch
    %11 = sbr.rel (0) target = $region9
  $region8: #{encoder_forward.15} parent=0 // pred_region
    _
  $region9: #{encoder_forward.15} parent=0 // pred_fallthru
    _
  // Predicated region
  $region10: #{encoder_forward.15} parent=0 // pred_check
    _
  $region11: #{encoder_forward.15} parent=0 // pred_check_branch
    %13 = sbr.rel (0) target = $region13
  $region12: #{encoder_forward.15} parent=0 // pred_region
    _
  $region13: #{encoder_forward.15} parent=0 // pred_fallthru
    _
  %v14 = vld [vmem:[%s0] sm:$0xff]
  %v15 = vld [vmem:[%s0 + $0x8] sm:$0xff]
  %v16 = vld [vmem:[%s1] sm:$0xff]
  %v17 = vld [vmem:[%s1 + $0x8] sm:$0xff]
  %v18 = vld [vmem:[%s1 + $0x10] sm:$0xff]
  %v19 = vld [vmem:[%s1 + $0x18] sm:$0xff]
  %v20 = vld [vmem:[%s2] sm:$0x1]
  %v22 = vlaneseq
  %v23 = vshrl.u32 %v22, 7
  %v24 = vsub.s32 0, %v23
  %v25 = vrot.slane %v20, %v24
  %vm27 = vcmask 261120
  %v29 = vsel %vm27, %v14, 0
  %v32 = vsel %vm27, %v15, 0
  %34 = vmatprep.subr.mxu0 0.0
  %35 = vmatpush1.msra.mxu0 %v16
  %36 = vmatprep.subr.mxu0 0.0
  %37 = vmatpush1.msra.mxu0 %v17
  %38 = vmatprep.subr.mxu0 0.0
  %39 = vmatpush1.msra.mxu0 %v18
  %40 = vmatprep.subr.mxu0 0.0
  %41 = vmatpush1.msra.mxu0 %v19
  %42 = vmatprep.subr.mxu0 0.0
  %43 = vmatpush1.msra.mxu0 0.0
  %44 = vmatprep.subr.mxu0 0.0
  %45 = vmatpush1.msra.mxu0 0.0
  %46 = vmatprep.subr.mxu0 0.0
  %47 = vmatpush1.msra.mxu0 0.0
  %48 = vmatprep.subr.mxu0 0.0
  %49 = vmatpush1.msra.mxu0 0.0
  %50 = vmatprep.subr.mxu0 0.0
  %51 = vmatpush1.msra.mxu0 0.0
  %52 = vmatprep.subr.mxu0 0.0
  %53 = vmatpush1.msra.mxu0 0.0
  %54 = vmatprep.subr.mxu0 0.0
  %55 = vmatpush1.msra.mxu0 0.0
  %56 = vmatprep.subr.mxu0 0.0
  %57 = vmatpush1.msra.mxu0 0.0
  %58 = vmatprep.subr.mxu0 0.0
  %59 = vmatpush1.msra.mxu0 0.0
  %60 = vmatprep.subr.mxu0 0.0
  %61 = vmatpush1.msra.mxu0 0.0
  %62 = vmatprep.subr.mxu0 0.0
  %63 = vmatpush1.msra.mxu0 0.0
  %64 = vmatprep.subr.mxu0 0.0
  %65 = vmatpush1.msra.mxu0 0.0
  %66 = vmatprep.subr.mxu0 0.0
  %67 = vmatpush1.msra.mxu0 0.0
  %68 = vmatprep.subr.mxu0 0.0
  %69 = vmatpush1.msra.mxu0 0.0
  %70 = vmatprep.subr.mxu0 0.0
  %71 = vmatpush1.msra.mxu0 0.0
  %72 = vmatprep.subr.mxu0 0.0
  %73 = vmatpush1.msra.mxu0 0.0
  %74 = vmatprep.subr.mxu0 0.0
  %75 = vmatpush1.msra.mxu0 0.0
  %76 = vmatprep.subr.mxu0 0.0
  %77 = vmatpush1.msra.mxu0 0.0
  %78 = vmatprep.subr.mxu0 0.0
  %79 = vmatpush1.msra.mxu0 0.0
  %80 = vmatprep.subr.mxu0 0.0
  %81 = vmatpush1.msra.mxu0 0.0
  %82 = vmatprep.subr.mxu0 0.0
  %83 = vmatpush1.msra.mxu0 0.0
  %84 = vmatprep.subr.mxu0 0.0
  %85 = vmatpush1.msra.mxu0 0.0
  %86 = vmatprep.subr.mxu0 0.0
  %87 = vmatpush1.msra.mxu0 0.0
  %88 = vmatprep.subr.mxu0 0.0
  %89 = vmatpush1.msra.mxu0 0.0
  %90 = vmatprep.subr.mxu0 0.0
  %91 = vmatpush1.msra.mxu0 0.0
  %92 = vmatprep.subr.mxu0 0.0
  %93 = vmatpush1.msra.mxu0 0.0
  %94 = vmatprep.subr.mxu0 0.0
  %95 = vmatpush1.msra.mxu0 0.0
  %96 = vmatprep.subr.mxu0 0.0
  %97 = vmatpush1.msra.mxu0 0.0
  %98 = vmatprep.mubr.f32.mxu0 0.0
  %99 = vmatmul.mubr.f32.gmra.mrb[0].mxu0 %v29
  %v100 = vpop.f32.mrb[0].mxu0
  %v101 = vadd.f32 %v25, %v100
  %v102 = vpop.f32.mrb[0].mxu0
  %103 = vmatprep.mubr.f32.mxu0 0.0
  %104 = vmatmul.mubr.f32.gmra.mrb[0].mxu0 %v32
  %v105 = vpop.f32.mrb[0].mxu0
  %v106 = vadd.f32 %v25, %v105
  %v107 = vpop.f32.mrb[0].mxu0
  %108 = vdwg.mxu0
  %vm109 = vcmask 785408
  %110 = vst.msk [vmem:[%s3] sm:$0xff] %vm109, %v101
  %111 = vst.msk [vmem:[%s3 + $0x8] sm:$0xff] %vm109, %v106
  // Predicated region
  $region14: #{encoder_forward.15} parent=0 // pred_check
    _
  $region15: #{encoder_forward.15} parent=0 // pred_check_branch
    %113 = sbr.rel (0) target = $region17
  $region16: #{encoder_forward.15} parent=0 // pred_region
    _
  $region17: #{encoder_forward.15} parent=0 // pred_fallthru
    _
  // Predicated region
  $region18: #{encoder_forward.15} parent=0 // pred_check
    _
  $region19: #{encoder_forward.15} parent=0 // pred_check_branch
    %115 = sbr.rel (0) target = $region21
  $region20: #{encoder_forward.15} parent=0 // pred_region
    _
  $region21: #{encoder_forward.15} parent=0 // pred_fallthru
    _

// kernel: encoder_forward.17
$region0: #{encoder_forward.17}
  #allocation0 [shape = 'u32[]', space=smem, size = 0x4, offset = 0x4, fixed_abs, tag = 'smem constant byte address 0x4 - core index']
  #allocation1 [shape = 'u32[144,128]{1,0:T(1,128)}', space=vmem, size = 0x12000, scoped, tag = 'internal scratch']
  %s0 = inlined_call_operand.vmem [shape: f32[16,32], index: 0, kind: input, shape index: {}]
  %s1 = inlined_call_operand.vmem [shape: f32[32,32], index: 1, kind: input, shape index: {}]
  %s2 = inlined_call_operand.vmem [shape: f32[1,32], index: 2, kind: input, shape index: {}]
  %s3 = inlined_call_operand.vmem [shape: f32[16,32], index: 3, kind: output, shape index: {}]
  %s4 = sld [smem:[#allocation0]]
  $region22: #{encoder_forward.17} parent=0
    _
  %s6 = ssub.s32 1, %s4
  %s7 = scalar_select 0, %s6, %s4
  // Predicated region
  $region2: #{encoder_forward.17} parent=0 // pred_check
    _
  $region3: #{encoder_forward.17} parent=0 // pred_check_branch
    %9 = sbr.rel (0) target = $region5
  $region4: #{encoder_forward.17} parent=0 // pred_region
    _
  $region5: #{encoder_forward.17} parent=0 // pred_fallthru
    _
  // Predicated region
  $region6: #{encoder_forward.17} parent=0 // pred_check
    _
  $region7: #{encoder_forward.17} parent=0 // pred_check_branch
    %11 = sbr.rel (0) target = $region9
  $region8: #{encoder_forward.17} parent=0 // pred_region
    _
  $region9: #{encoder_forward.17} parent=0 // pred_fallthru
    _
  // Predicated region
  $region10: #{encoder_forward.17} parent=0 // pred_check
    _
  $region11: #{encoder_forward.17} parent=0 // pred_check_branch
    %13 = sbr.rel (0) target = $region13
  $region12: #{encoder_forward.17} parent=0 // pred_region
    _
  $region13: #{encoder_forward.17} parent=0 // pred_fallthru
    _
  %v14 = vld [vmem:[%s0] sm:$0xff]
  %v15 = vld [vmem:[%s0 + $0x8] sm:$0xff]
  %v16 = vld [vmem:[%s1] sm:$0xff]
  %v17 = vld [vmem:[%s1 + $0x8] sm:$0xff]
  %v18 = vld [vmem:[%s1 + $0x10] sm:$0xff]
  %v19 = vld [vmem:[%s1 + $0x18] sm:$0xff]
  %v20 = vld [vmem:[%s2] sm:$0x1]
  %v22 = vlaneseq
  %v23 = vshrl.u32 %v22, 7
  %v24 = vsub.s32 0, %v23
  %v25 = vrot.slane %v20, %v24
  %vm27 = vcmask 261120
  %v29 = vsel %vm27, %v14, 0
  %v32 = vsel %vm27, %v15, 0
  %34 = vmatprep.subr.mxu0 0.0
  %35 = vmatpush1.msra.mxu0 %v16
  %36 = vmatprep.subr.mxu0 0.0
  %37 = vmatpush1.msra.mxu0 %v17
  %38 = vmatprep.subr.mxu0 0.0
  %39 = vmatpush1.msra.mxu0 %v18
  %40 = vmatprep.subr.mxu0 0.0
  %41 = vmatpush1.msra.mxu0 %v19
  %42 = vmatprep.subr.mxu0 0.0
  %43 = vmatpush1.msra.mxu0 0.0
  %44 = vmatprep.subr.mxu0 0.0
  %45 = vmatpush1.msra.mxu0 0.0
  %46 = vmatprep.subr.mxu0 0.0
  %47 = vmatpush1.msra.mxu0 0.0
  %48 = vmatprep.subr.mxu0 0.0
  %49 = vmatpush1.msra.mxu0 0.0
  %50 = vmatprep.subr.mxu0 0.0
  %51 = vmatpush1.msra.mxu0 0.0
  %52 = vmatprep.subr.mxu0 0.0
  %53 = vmatpush1.msra.mxu0 0.0
  %54 = vmatprep.subr.mxu0 0.0
  %55 = vmatpush1.msra.mxu0 0.0
  %56 = vmatprep.subr.mxu0 0.0
  %57 = vmatpush1.msra.mxu0 0.0
  %58 = vmatprep.subr.mxu0 0.0
  %59 = vmatpush1.msra.mxu0 0.0
  %60 = vmatprep.subr.mxu0 0.0
  %61 = vmatpush1.msra.mxu0 0.0
  %62 = vmatprep.subr.mxu0 0.0
  %63 = vmatpush1.msra.mxu0 0.0
  %64 = vmatprep.subr.mxu0 0.0
  %65 = vmatpush1.msra.mxu0 0.0
  %66 = vmatprep.subr.mxu0 0.0
  %67 = vmatpush1.msra.mxu0 0.0
  %68 = vmatprep.subr.mxu0 0.0
  %69 = vmatpush1.msra.mxu0 0.0
  %70 = vmatprep.subr.mxu0 0.0
  %71 = vmatpush1.msra.mxu0 0.0
  %72 = vmatprep.subr.mxu0 0.0
  %73 = vmatpush1.msra.mxu0 0.0
  %74 = vmatprep.subr.mxu0 0.0
  %75 = vmatpush1.msra.mxu0 0.0
  %76 = vmatprep.subr.mxu0 0.0
  %77 = vmatpush1.msra.mxu0 0.0
  %78 = vmatprep.subr.mxu0 0.0
  %79 = vmatpush1.msra.mxu0 0.0
  %80 = vmatprep.subr.mxu0 0.0
  %81 = vmatpush1.msra.mxu0 0.0
  %82 = vmatprep.subr.mxu0 0.0
  %83 = vmatpush1.msra.mxu0 0.0
  %84 = vmatprep.subr.mxu0 0.0
  %85 = vmatpush1.msra.mxu0 0.0
  %86 = vmatprep.subr.mxu0 0.0
  %87 = vmatpush1.msra.mxu0 0.0
  %88 = vmatprep.subr.mxu0 0.0
  %89 = vmatpush1.msra.mxu0 0.0
  %90 = vmatprep.subr.mxu0 0.0
  %91 = vmatpush1.msra.mxu0 0.0
  %92 = vmatprep.subr.mxu0 0.0
  %93 = vmatpush1.msra.mxu0 0.0
  %94 = vmatprep.subr.mxu0 0.0
  %95 = vmatpush1.msra.mxu0 0.0
  %96 = vmatprep.subr.mxu0 0.0
  %97 = vmatpush1.msra.mxu0 0.0
  %98 = vmatprep.mubr.f32.mxu0 0.0
  %99 = vmatmul.mubr.f32.gmra.mrb[0].mxu0 %v29
  %v100 = vpop.f32.mrb[0].mxu0
  %v101 = vadd.f32 %v25, %v100
  %v102 = vpop.f32.mrb[0].mxu0
  %103 = vmatprep.mubr.f32.mxu0 0.0
  %104 = vmatmul.mubr.f32.gmra.mrb[0].mxu0 %v32
  %v105 = vpop.f32.mrb[0].mxu0
  %v106 = vadd.f32 %v25, %v105
  %v107 = vpop.f32.mrb[0].mxu0
  %108 = vdwg.mxu0
  %109 = vst.msk [vmem:[%s3] sm:$0xff] %vm27, %v101
  %110 = vst.msk [vmem:[%s3 + $0x8] sm:$0xff] %vm27, %v106
  // Predicated region
  $region14: #{encoder_forward.17} parent=0 // pred_check
    _
  $region15: #{encoder_forward.17} parent=0 // pred_check_branch
    %112 = sbr.rel (0) target = $region17
  $region16: #{encoder_forward.17} parent=0 // pred_region
    _
  $region17: #{encoder_forward.17} parent=0 // pred_fallthru
    _
  // Predicated region
  $region18: #{encoder_forward.17} parent=0 // pred_check
    _
  $region19: #{encoder_forward.17} parent=0 // pred_check_branch
    %114 = sbr.rel (0) target = $region21
  $region20: #{encoder_forward.17} parent=0 // pred_region
    _
  $region21: #{encoder_forward.17} parent=0 // pred_fallthru
    _

// kernel: encoder_forward.18
$region0: #{encoder_forward.18}
  #allocation0 [shape = 'u32[]', space=smem, size = 0x4, offset = 0x4, fixed_abs, tag = 'smem constant byte address 0x4 - core index']
  #allocation1 [shape = 'u32[144,128]{1,0:T(1,128)}', space=vmem, size = 0x12000, scoped, tag = 'internal scratch']
  %s0 = inlined_call_operand.vmem [shape: f32[16,32], index: 0, kind: input, shape index: {}]
  %s1 = inlined_call_operand.vmem [shape: f32[16,32], index: 1, kind: input, shape index: {}]
  %s2 = inlined_call_operand.vmem [shape: f32[1,32], index: 2, kind: input, shape index: {}]
  %s3 = inlined_call_operand.vmem [shape: f32[1,32], index: 3, kind: input, shape index: {}]
  %s4 = inlined_call_operand.vmem [shape: f32[16,32], index: 4, kind: output, shape index: {}]
  %s5 = sld [smem:[#allocation0]]
  $region26: #{encoder_forward.18} parent=0
    _
  %s7 = ssub.s32 1, %s5
  %s8 = scalar_select 0, %s7, %s5
  // Predicated region
  $region2: #{encoder_forward.18} parent=0 // pred_check
    _
  $region3: #{encoder_forward.18} parent=0 // pred_check_branch
    %10 = sbr.rel (0) target = $region5
  $region4: #{encoder_forward.18} parent=0 // pred_region
    _
  $region5: #{encoder_forward.18} parent=0 // pred_fallthru
    _
  // Predicated region
  $region6: #{encoder_forward.18} parent=0 // pred_check
    _
  $region7: #{encoder_forward.18} parent=0 // pred_check_branch
    %12 = sbr.rel (0) target = $region9
  $region8: #{encoder_forward.18} parent=0 // pred_region
    _
  $region9: #{encoder_forward.18} parent=0 // pred_fallthru
    _
  // Predicated region
  $region10: #{encoder_forward.18} parent=0 // pred_check
    _
  $region11: #{encoder_forward.18} parent=0 // pred_check_branch
    %14 = sbr.rel (0) target = $region13
  $region12: #{encoder_forward.18} parent=0 // pred_region
    _
  $region13: #{encoder_forward.18} parent=0 // pred_fallthru
    _
  // Predicated region
  $region14: #{encoder_forward.18} parent=0 // pred_check
    _
  $region15: #{encoder_forward.18} parent=0 // pred_check_branch
    %16 = sbr.rel (0) target = $region17
  $region16: #{encoder_forward.18} parent=0 // pred_region
    _
  $region17: #{encoder_forward.18} parent=0 // pred_fallthru
    _
  %v17 = vld [vmem:[%s0] sm:$0xff]
  %v18 = vld [vmem:[%s0 + $0x8] sm:$0xff]
  %v19 = vld [vmem:[%s1] sm:$0xff]
  %v20 = vld [vmem:[%s1 + $0x8] sm:$0xff]
  %v21 = vadd.f32 %v17, %v19
  %v22 = vadd.f32 %v18, %v20
  %vm23 = vcmask 261120
  %v24 = vsel %vm23, %v21, 0.0
  %25 = vadd.xlane.f32.xlu0 %v24
  %v26 = vpop.xlane.xlu0 %25
  %v27 = vsel %vm23, %v22, 0.0
  %28 = vadd.xlane.f32.xlu0 %v27
  %v29 = vpop.xlane.xlu0 %28
  %v30 = vrcp.pop 32.0
  %v31 = vmul.f32 %v26, %v30
  %v32 = vmul.f32 %v29, %v30
  %v33 = vsub.f32 %v21, %v31
  %v34 = vsub.f32 %v22, %v32
  %v35 = vmul.f32 %v33, %v33
  %v36 = vmul.f32 %v34, %v34
  %v37 = vsel %vm23, %v35, 0.0
  %38 = vadd.xlane.f32.xlu0 %v37
  %v39 = vpop.xlane.xlu0 %38
  %v40 = vsel %vm23, %v36, 0.0
  %41 = vadd.xlane.f32.xlu0 %v40
  %v42 = vpop.xlane.xlu0 %41
  %v43 = vmul.f32 %v39, %v30
  %v44 = vmul.f32 %v42, %v30
  %v45 = vadd.f32 %v43, 1e-05
  %v46 = vadd.f32 %v44, 1e-05
  %v47 = vrsqrt.pop %v45
  %v48 = vrsqrt.pop %v46
  %v49 = vmul.f32 %v33, %v47
  %v50 = vmul.f32 %v34, %v48
  %v51 = vld [vmem:[%s2] sm:$0x1]
  %v53 = vlaneseq
  %v54 = vshrl.u32 %v53, 7
  %v55 = vsub.s32 0, %v54
  %v56 = vrot.slane %v51, %v55
  %v58 = vmul.f32 %v49, %v56
  %v59 = vmul.f32 %v50, %v56
  %v60 = vld [vmem:[%s3] sm:$0x1]
  %v62 = vlaneseq
  %v63 = vshrl.u32 %v62, 7
  %v64 = vsub.s32 0, %v63
  %v65 = vrot.slane %v60, %v64
  %v67 = vadd.f32 %v58, %v65
  %v68 = vadd.f32 %v59, %v65
  %69 = vst.msk [vmem:[%s4] sm:$0xff] %vm23, %v67
  %70 = vst.msk [vmem:[%s4 + $0x8] sm:$0xff] %vm23, %v68
  // Predicated region
  $region18: #{encoder_forward.18} parent=0 // pred_check
    _
  $region19: #{encoder_forward.18} parent=0 // pred_check_branch
    %72 = sbr.rel (0) target = $region21
  $region20: #{encoder_forward.18} parent=0 // pred_region
    _
  $region21: #{encoder_forward.18} parent=0 // pred_fallthru
    _
  // Predicated region
  $region22: #{encoder_forward.18} parent=0 // pred_check
    _
  $region23: #{encoder_forward.18} parent=0 // pred_check_branch
    %74 = sbr.rel (0) target = $region25
  $region24: #{encoder_forward.18} parent=0 // pred_region
    _
  $region25: #{encoder_forward.18} parent=0 // pred_fallthru
    _

// kernel: encoder_forward.16
$region0: #{encoder_forward.16}
  #allocation0 [shape = 'u32[]', space=smem, size = 0x4, offset = 0x4, fixed_abs, tag = 'smem constant byte address 0x4 - core index']
  #allocation1 [shape = 'u32[144,128]{1,0:T(1,128)}', space=vmem, size = 0x12000, scoped, tag = 'internal scratch']
  %s0 = inlined_call_operand.vmem [shape: f32[2,4,8,8], index: 0, kind: input, shape index: {}]
  %s1 = inlined_call_operand.vmem [shape: f32[2,4,8,8], index: 1, kind: input, shape index: {}]
  %s2 = inlined_call_operand.vmem [shape: f32[2,4,8,8], index: 2, kind: input, shape index: {}]
  %s3 = inlined_call_operand.vmem [shape: f32[2,4,8,8], index: 3, kind: output, shape index: {}]
  %s4 = sld [smem:[#allocation0]]
  $region45: #{encoder_forward.16} parent=0
    _
  %s6 = ssub.s32 1, %s4
  %s7 = scalar_select 0, %s6, %s4
  loop: start=0, step=1, limit=4
  $region2: #{encoder_forward.16} parent=0 // loop_pre_header
    _
  $region3: #{encoder_forward.16} parent=0 // loop_header
    %s9 = sphi 0, %s13
    %p10 = scmp.ge.s32.totalorder %s9, 4
    %s19 = sphi 0, %s21
    %s22 = sphi 0, %s19
    %s23 = sphi 0, %s22
    %s39 = sphi 0, %s23
    %s45 = sphi 0, %s47
    %s48 = sphi 0, %s45
    %s49 = sphi 0, %s48
    %s65 = sphi 0, %s49
    %s71 = sphi 0, %s73
    %s74 = sphi 0, %s71
    %s75 = sphi 0, %s74
    %s91 = sphi 0, %s75
    %s97 = sphi 0, %s99
    %s100 = sphi 0, %s97
    %s101 = sphi 0, %s100
    %s117 = sphi 0, %s101
  $region4: #{encoder_forward.16} parent=0 // loop_header_branch
    %12 = sbr.rel (%p10) target = $region8
  $region5: #{encoder_forward.16} parent=0 // loop_body
    %s14 = ssub.s32 %s9, 1
    %s15 = ssub.s32 %s9, 2
    %s16 = sadd.s32 %s9, 1
    %s17 = ssub.s32 %s9, %s16
    %p18 = scmp.eq.s32.totalorder %s17, 0
    %s20 = sadd.s32 %s19, 1
    %s21 = scalar_select %p18, %s19, %s20
    %p24 = pneg %p18
    %p25 = scmp.eq.s32.totalorder %s9, 1
    %p26 = por %p24, %p25
    %p27 = scmp.ne.s32.totalorder %s19, %s22
    %p28 = scmp.eq.s32.totalorder %s9, 0
    %p29 = por %p27, %p28
    %p30 = scmp.ne.s32.totalorder %s19, %s22
    %p31 = scmp.eq.s32.totalorder %s14, 1
    %p32 = por %p30, %p31
    %p33 = scmp.ne.s32.totalorder %s22, %s23
    %p34 = scmp.eq.s32.totalorder %s14, 0
    %p35 = por %p33, %p34
    %p36 = scmp.ne.s32.totalorder %s22, %s23
    %p37 = scmp.eq.s32.totalorder %s15, 1
    %p38 = por %p36, %p37
    %p40 = scmp.ne.s32.totalorder %s23, %s39
    %p41 = scmp.eq.s32.totalorder %s15, 0
    %p42 = por %p40, %p41
    %s43 = ssub.s32 %s9, %s16
    %p44 = scmp.eq.s32.totalorder %s43, 0
    %s46 = sadd.s32 %s45, 1
    %s47 = scalar_select %p44, %s45, %s46
    %p50 = pneg %p44
    %p51 = scmp.eq.s32.totalorder %s9, 1
    %p52 = por %p50, %p51
    %p53 = scmp.ne.s32.totalorder %s45, %s48
    %p54 = scmp.eq.s32.totalorder %s9, 0
    %p55 = por %p53, %p54
    %p56 = scmp.ne.s32.totalorder %s45, %s48
    %p57 = scmp.eq.s32.totalorder %s14, 1
    %p58 = por %p56, %p57
    %p59 = scmp.ne.s32.totalorder %s48, %s49
    %p60 = scmp.eq.s32.totalorder %s14, 0
    %p61 = por %p59, %p60
    %p62 = scmp.ne.s32.totalorder %s48, %s49
    %p63 = scmp.eq.s32.totalorder %s15, 1
    %p64 = por %p62, %p63
    %p66 = scmp.ne.s32.totalorder %s49, %s65
    %p67 = scmp.eq.s32.totalorder %s15, 0
    %p68 = por %p66, %p67
    %s69 = ssub.s32 %s9, %s16
    %p70 = scmp.eq.s32.totalorder %s69, 0
    %s72 = sadd.s32 %s71, 1
    %s73 = scalar_select %p70, %s71, %s72
    %p76 = pneg %p70
    %p77 = scmp.eq.s32.totalorder %s9, 1
    %p78 = por %p76, %p77
    %p79 = scmp.ne.s32.totalorder %s71, %s74
    %p80 = scmp.eq.s32.totalorder %s9, 0
    %p81 = por %p79, %p80
    %p82 = scmp.ne.s32.totalorder %s71, %s74
    %p83 = scmp.eq.s32.totalorder %s14, 1
    %p84 = por %p82, %p83
    %p85 = scmp.ne.s32.totalorder %s74, %s75
    %p86 = scmp.eq.s32.totalorder %s14, 0
    %p87 = por %p85, %p86
    %p88 = scmp.ne.s32.totalorder %s74, %s75
    %p89 = scmp.eq.s32.totalorder %s15, 1
    %p90 = por %p88, %p89
    %p92 = scmp.ne.s32.totalorder %s75, %s91
    %p93 = scmp.eq.s32.totalorder %s15, 0
    %p94 = por %p92, %p93
    %s95 = ssub.s32 %s9, %s16
    %p96 = scmp.eq.s32.totalorder %s95, 0
    %s98 = sadd.s32 %s97, 1
    %s99 = scalar_select %p96, %s97, %s98
    %p102 = pneg %p96
    %p103 = scmp.eq.s32.totalorder %s9, 1
    %p104 = por %p102, %p103
    %p105 = scmp.ne.s32.totalorder %s97, %s100
    %p106 = scmp.eq.s32.totalorder %s9, 0
    %p107 = por %p105, %p106
    %p108 = scmp.ne.s32.totalorder %s97, %s100
    %p109 = scmp.eq.s32.totalorder %s14, 1
    %p110 = por %p108, %p109
    %p111 = scmp.ne.s32.totalorder %s100, %s101
    %p112 = scmp.eq.s32.totalorder %s14, 0
    %p113 = por %p111, %p112
    %p114 = scmp.ne.s32.totalorder %s100, %s101
    %p115 = scmp.eq.s32.totalorder %s15, 1
    %p116 = por %p114, %p115
    %p118 = scmp.ne.s32.totalorder %s101, %s117
    %p119 = scmp.eq.s32.totalorder %s15, 0
    %p120 = por %p118, %p119
    %p121 = scmp.le.s32.totalorder 1, %s9
    %p122 = scmp.lt.s32.totalorder %s9, 3
    %p123 = pnand %p121, %p122
    %p124 = pneg %p123
    // Predicated region
    $region9: #{encoder_forward.16} parent=5 // pred_check
      _
    $region10: #{encoder_forward.16} parent=5 // pred_check_branch
      %126 = sbr.rel (%p123) target = $region12
    $region11: #{encoder_forward.16} parent=5 // pred_region
      %s127 = ssub.s32 %s9, 1
    $region12: #{encoder_forward.16} parent=5 // pred_fallthru
      _
    %p128 = scmp.lt.s32.totalorder %s9, 2
    // Predicated region
    $region13: #{encoder_forward.16} parent=5 // pred_check
      %p129 = pneg %p128
    $region14: #{encoder_forward.16} parent=5 // pred_check_branch
      %131 = sbr.rel (%p129) target = $region16
    $region15: #{encoder_forward.16} parent=5 // pred_region
      // Predicated region
      $region17: #{encoder_forward.16} parent=15 // pred_check
        %p132 = pneg %p29
      $region18: #{encoder_forward.16} parent=15 // pred_check_branch
        %134 = sbr.rel (%p132) target = $region20
      $region19: #{encoder_forward.16} parent=15 // pred_region
        %p135 = scmp.lt.s32.totalorder %s9, 1
        %s136 = scalar_select %p135, %s9, 1
        %s137 = smul.addr %s136, 4
        %s138 = smul.addr %s137, 8
        %s139 = scalar_lea.vmem %s0, %s138
      $region20: #{encoder_forward.16} parent=15 // pred_fallthru
        _
      // Predicated region
      $region21: #{encoder_forward.16} parent=15 // pred_check
        %p140 = pneg %p55
      $region22: #{encoder_forward.16} parent=15 // pred_check_branch
        %142 = sbr.rel (%p140) target = $region24
      $region23: #{encoder_forward.16} parent=15 // pred_region
        %p143 = scmp.lt.s32.totalorder %s9, 1
        %s144 = scalar_select %p143, %s9, 1
        %s145 = smul.addr %s144, 4
        %s146 = smul.addr %s145, 8
        %s147 = scalar_lea.vmem %s1, %s146
      $region24: #{encoder_forward.16} parent=15 // pred_fallthru
        _
      // Predicated region
      $region25: #{encoder_forward.16} parent=15 // pred_check
        %p148 = pneg %p81
      $region26: #{encoder_forward.16} parent=15 // pred_check_branch
        %150 = sbr.rel (%p148) target = $region28
      $region27: #{encoder_forward.16} parent=15 // pred_region
        %p151 = scmp.lt.s32.totalorder %s9, 1
        %s152 = scalar_select %p151, %s9, 1
        %s153 = smul.addr %s152, 4
        %s154 = smul.addr %s153, 8
        %s155 = scalar_lea.vmem %s2, %s154
      $region28: #{encoder_forward.16} parent=15 // pred_fallthru
        _
    $region16: #{encoder_forward.16} parent=5 // pred_fallthru
      _
    %p156 = scmp.le.s32.totalorder 1, %s9
    %p157 = scmp.lt.s32.totalorder %s9, 3
    %p158 = pnand %p156, %p157
    %p159 = pneg %p158
    // Predicated region
    $region29: #{encoder_forward.16} parent=5 // pred_check
      _
    $region30: #{encoder_forward.16} parent=5 // pred_check_branch
      %161 = sbr.rel (%p158) target = $region32
    $region31: #{encoder_forward.16} parent=5 // pred_region
      %s162 = ssub.s32 %s9, 1
      %p163 = scmp.lt.s32.totalorder %s14, 1
      %s164 = scalar_select %p163, %s14, 1
      %s165 = smul.addr %s164, 4
      %s166 = smul.addr %s165, 8
      %s167 = scalar_lea.vmem %s0, %s166
      %p168 = pneg %p35
      %p169 = pneg %p32
      %p170 = scmp.lt.s32.totalorder %s14, 1
      %s171 = scalar_select %p170, %s14, 1
      %s172 = smul.addr %s171, 4
      %s173 = smul.addr %s172, 8
      %s174 = scalar_lea.vmem %s1, %s173
      %p175 = pneg %p61
      %p176 = pneg %p58
      %p177 = scmp.lt.s32.totalorder %s14, 1
      %s178 = scalar_select %p177, %s14, 1
      %s179 = smul.addr %s178, 4
      %s180 = smul.addr %s179, 8
      %s181 = scalar_lea.vmem %s2, %s180
      %p182 = pneg %p87
      %p183 = pneg %p84
      %p184 = pneg %p113
      %p185 = pneg %p110
      %p186 = scmp.lt.s32.totalorder %s14, 1
      %s187 = scalar_select %p186, %s14, 1
      %s188 = smul.addr %s187, 4
      %s189 = smul.addr %s188, 8
      %s190 = scalar_lea.vmem %s3, %s189
      %p191 = scmp.lt.s32.totalorder %s14, 1
      %s192 = scalar_select %p191, %s14, 1
      %s193 = smul.addr %s192, 4
      %s194 = smul.addr %s193, 8
      %s195 = scalar_lea.vmem %s0, %s194
      %p196 = scmp.lt.s32.totalorder %s14, 1
      %s197 = scalar_select %p196, %s14, 1
      %s198 = smul.addr %s197, 4
      %s199 = smul.addr %s198, 8
      %s200 = scalar_lea.vmem %s1, %s199
      %p201 = scmp.lt.s32.totalorder %s14, 1
      %s202 = scalar_select %p201, %s14, 1
      %s203 = smul.addr %s202, 4
      %s204 = smul.addr %s203, 8
      %s205 = scalar_lea.vmem %s2, %s204
      %p206 = scmp.lt.s32.totalorder %s14, 1
      %s207 = scalar_select %p206, %s14, 1
      %s208 = smul.addr %s207, 4
      %s209 = smul.addr %s208, 8
      %s210 = scalar_lea.vmem %s3, %s209
      %v211 = vld [vmem:[%s195] sm:$0xff]
      %v212 = vld [vmem:[%s195 + $0x8] sm:$0xff]
      %v213 = vld [vmem:[%s195 + $0x10] sm:$0xff]
      %v214 = vld [vmem:[%s195 + $0x18] sm:$0xff]
      %v215 = vmul.f32 %v211, 0.35355338
      %v216 = vmul.f32 %v212, 0.35355338
      %v217 = vmul.f32 %v213, 0.35355338
      %v218 = vmul.f32 %v214, 0.35355338
      %v219 = vld [vmem:[%s200] sm:$0xff]
      %v220 = vld [vmem:[%s200 + $0x8] sm:$0xff]
      %v221 = vld [vmem:[%s200 + $0x10] sm:$0xff]
      %v222 = vld [vmem:[%s200 + $0x18] sm:$0xff]
      %v223 = vld [vmem:[%s205] sm:$0xff]
      %v224 = vld [vmem:[%s205 + $0x8] sm:$0xff]
      %v225 = vld [vmem:[%s205 + $0x10] sm:$0xff]
      %v226 = vld [vmem:[%s205 + $0x18] sm:$0xff]
      %vm227 = vcmask 64512
      %v229 = vsel %vm227, %v215, 0
      %v232 = vsel %vm227, %v219, 0
      %234 = vmatprep.subr.mxu0 0.0
      %235 = vmatpush1.xpose.msra.mxu0 %v232
      %236 = vmatprep.subr.mxu0 0.0
      %237 = vmatpush1.xpose.msra.mxu0 0.0
      %238 = vmatprep.subr.mxu0 0.0
      %239 = vmatpush1.xpose.msra.mxu0 0.0
      %240 = vmatprep.subr.mxu0 0.0
      %241 = vmatpush1.xpose.msra.mxu0 0.0
      %242 = vmatprep.subr.mxu0 0.0
      %243 = vmatpush1.xpose.msra.mxu0 0.0
      %244 = vmatprep.subr.mxu0 0.0
      %245 = vmatpush1.xpose.msra.mxu0 0.0
      %246 = vmatprep.subr.mxu0 0.0
      %247 = vmatpush1.xpose.msra.mxu0 0.0
      %248 = vmatprep.subr.mxu0 0.0
      %249 = vmatpush1.xpose.msra.mxu0 0.0
      %250 = vmatprep.subr.mxu0 0.0
      %251 = vmatpush1.xpose.msra.mxu0 0.0
      %252 = vmatprep.subr.mxu0 0.0
      %253 = vmatpush1.xpose.msra.mxu0 0.0
      %254 = vmatprep.subr.mxu0 0.0
      %255 = vmatpush1.xpose.msra.mxu0 0.0
      %256 = vmatprep.subr.mxu0 0.0
      %257 = vmatpush1.xpose.msra.mxu0 0.0
      %258 = vmatprep.subr.mxu0 0.0
      %259 = vmatpush1.xpose.msra.mxu0 0.0
      %260 = vmatprep.subr.mxu0 0.0
      %261 = vmatpush1.xpose.msra.mxu0 0.0
      %262 = vmatprep.subr.mxu0 0.0
      %263 = vmatpush1.xpose.msra.mxu0 0.0
      %264 = vmatprep.subr.mxu0 0.0
      %265 = vmatpush1.xpose.msra.mxu0 0.0
      %266 = vmatprep.subr.mxu0 0.0
      %267 = vmatpush1.xpose.msra.mxu0 0.0
      %268 = vmatprep.subr.mxu0 0.0
      %269 = vmatpush1.xpose.msra.mxu0 0.0
      %270 = vmatprep.subr.mxu0 0.0
      %271 = vmatpush1.xpose.msra.mxu0 0.0
      %272 = vmatprep.subr.mxu0 0.0
      %273 = vmatpush1.xpose.msra.mxu0 0.0
      %274 = vmatprep.subr.mxu0 0.0
      %275 = vmatpush1.xpose.msra.mxu0 0.0
      %276 = vmatprep.subr.mxu0 0.0
      %277 = vmatpush1.xpose.msra.mxu0 0.0
      %278 = vmatprep.subr.mxu0 0.0
      %279 = vmatpush1.xpose.msra.mxu0 0.0
      %280 = vmatprep.subr.mxu0 0.0
      %281 = vmatpush1.xpose.msra.mxu0 0.0
      %282 = vmatprep.subr.mxu0 0.0
      %283 = vmatpush1.xpose.msra.mxu0 0.0
      %284 = vmatprep.subr.mxu0 0.0
      %285 = vmatpush1.xpose.msra.mxu0 0.0
      %286 = vmatprep.subr.mxu0 0.0
      %287 = vmatpush1.xpose.msra.mxu0 0.0
      %288 = vmatprep.subr.mxu0 0.0
      %289 = vmatpush1.xpose.msra.mxu0 0.0
      %290 = vmatprep.subr.mxu0 0.0
      %291 = vmatpush1.xpose.msra.mxu0 0.0
      %292 = vmatprep.subr.mxu0 0.0
      %293 = vmatpush1.xpose.msra.mxu0 0.0
      %294 = vmatprep.subr.mxu0 0.0
      %295 = vmatpush1.xpose.msra.mxu0 0.0
      %296 = vmatprep.subr.mxu0 0.0
      %297 = vmatpush1.xpose.msra.mxu0 0.0
      %298 = vmatprep.mubr.f32.mxu0 0.0
      %299 = vmatmul.mubr.f32.gmra.mrb[0].mxu0 %v229
      %v300 = vpop.f32.mrb[0].mxu0
      %v301 = vadd.f32 0.0, %v300
      %v302 = vpop.f32.mrb[0].mxu0
      %303 = vdwg.mxu0
      %v305 = vsel %vm227, %v216, 0
      %v308 = vsel %vm227, %v220, 0
      %310 = vmatprep.subr.mxu0 0.0
      %311 = vmatpush1.xpose.msra.mxu0 %v308
      %312 = vmatprep.subr.mxu0 0.0
      %313 = vmatpush1.xpose.msra.mxu0 0.0
      %314 = vmatprep.subr.mxu0 0.0
      %315 = vmatpush1.xpose.msra.mxu0 0.0
      %316 = vmatprep.subr.mxu0 0.0
      %317 = vmatpush1.xpose.msra.mxu0 0.0
      %318 = vmatprep.subr.mxu0 0.0
      %319 = vmatpush1.xpose.msra.mxu0 0.0
      %320 = vmatprep.subr.mxu0 0.0
      %321 = vmatpush1.xpose.msra.mxu0 0.0
      %322 = vmatprep.subr.mxu0 0.0
      %323 = vmatpush1.xpose.msra.mxu0 0.0
      %324 = vmatprep.subr.mxu0 0.0
      %325 = vmatpush1.xpose.msra.mxu0 0.0
      %326 = vmatprep.subr.mxu0 0.0
      %327 = vmatpush1.xpose.msra.mxu0 0.0
      %328 = vmatprep.subr.mxu0 0.0
      %329 = vmatpush1.xpose.msra.mxu0 0.0
      %330 = vmatprep.subr.mxu0 0.0
      %331 = vmatpush1.xpose.msra.mxu0 0.0
      %332 = vmatprep.subr.mxu0 0.0
      %333 = vmatpush1.xpose.msra.mxu0 0.0
      %334 = vmatprep.subr.mxu0 0.0
      %335 = vmatpush1.xpose.msra.mxu0 0.0
      %336 = vmatprep.subr.mxu0 0.0
      %337 = vmatpush1.xpose.msra.mxu0 0.0
      %338 = vmatprep.subr.mxu0 0.0
      %339 = vmatpush1.xpose.msra.mxu0 0.0
      %340 = vmatprep.subr.mxu0 0.0
      %341 = vmatpush1.xpose.msra.mxu0 0.0
      %342 = vmatprep.subr.mxu0 0.0
      %343 = vmatpush1.xpose.msra.mxu0 0.0
      %344 = vmatprep.subr.mxu0 0.0
      %345 = vmatpush1.xpose.msra.mxu0 0.0
      %346 = vmatprep.subr.mxu0 0.0
      %347 = vmatpush1.xpose.msra.mxu0 0.0
      %348 = vmatprep.subr.mxu0 0.0
      %349 = vmatpush1.xpose.msra.mxu0 0.0
      %350 = vmatprep.subr.mxu0 0.0
      %351 = vmatpush1.xpose.msra.mxu0 0.0
      %352 = vmatprep.subr.mxu0 0.0
      %353 = vmatpush1.xpose.msra.mxu0 0.0
      %354 = vmatprep.subr.mxu0 0.0
      %355 = vmatpush1.xpose.msra.mxu0 0.0
      %356 = vmatprep.subr.mxu0 0.0
      %357 = vmatpush1.xpose.msra.mxu0 0.0
      %358 = vmatprep.subr.mxu0 0.0
      %359 = vmatpush1.xpose.msra.mxu0 0.0
      %360 = vmatprep.subr.mxu0 0.0
      %361 = vmatpush1.xpose.msra.mxu0 0.0
      %362 = vmatprep.subr.mxu0 0.0
      %363 = vmatpush1.xpose.msra.mxu0 0.0
      %364 = vmatprep.subr.mxu0 0.0
      %365 = vmatpush1.xpose.msra.mxu0 0.0
      %366 = vmatprep.subr.mxu0 0.0
      %367 = vmatpush1.xpose.msra.mxu0 0.0
      %368 = vmatprep.subr.mxu0 0.0
      %369 = vmatpush1.xpose.msra.mxu0 0.0
      %370 = vmatprep.subr.mxu0 0.0
      %371 = vmatpush1.xpose.msra.mxu0 0.0
      %372 = vmatprep.subr.mxu0 0.0
      %373 = vmatpush1.xpose.msra.mxu0 0.0
      %374 = vmatprep.mubr.f32.mxu0 0.0
      %375 = vmatmul.mubr.f32.gmra.mrb[0].mxu0 %v305
      %v376 = vpop.f32.mrb[0].mxu0
      %v377 = vadd.f32 0.0, %v376
      %v378 = vpop.f32.mrb[0].mxu0
      %379 = vdwg.mxu0
      %v381 = vsel %vm227, %v217, 0
      %v384 = vsel %vm227, %v221, 0
      %386 = vmatprep.subr.mxu0 0.0
      %387 = vmatpush1.xpose.msra.mxu0 %v384
      %388 = vmatprep.subr.mxu0 0.0
      %389 = vmatpush1.xpose.msra.mxu0 0.0
      %390 = vmatprep.subr.mxu0 0.0
      %391 = vmatpush1.xpose.msra.mxu0 0.0
      %392 = vmatprep.subr.mxu0 0.0
      %393 = vmatpush1.xpose.msra.mxu0 0.0
      %394 = vmatprep.subr.mxu0 0.0
      %395 = vmatpush1.xpose.msra.mxu0 0.0
      %396 = vmatprep.subr.mxu0 0.0
      %397 = vmatpush1.xpose.msra.mxu0 0.0
      %398 = vmatprep.subr.mxu0 0.0
      %399 = vmatpush1.xpose.msra.mxu0 0.0
      %400 = vmatprep.subr.mxu0 0.0
      %401 = vmatpush1.xpose.msra.mxu0 0.0
      %402 = vmatprep.subr.mxu0 0.0
      %403 = vmatpush1.xpose.msra.mxu0 0.0
      %404 = vmatprep.subr.mxu0 0.0
      %405 = vmatpush1.xpose.msra.mxu0 0.0
      %406 = vmatprep.subr.mxu0 0.0
      %407 = vmatpush1.xpose.msra.mxu0 0.0
      %408 = vmatprep.subr.mxu0 0.0
      %409 = vmatpush1.xpose.msra.mxu0 0.0
      %410 = vmatprep.subr.mxu0 0.0
      %411 = vmatpush1.xpose.msra.mxu0 0.0
      %412 = vmatprep.subr.mxu0 0.0
      %413 = vmatpush1.xpose.msra.mxu0 0.0
      %414 = vmatprep.subr.mxu0 0.0
      %415 = vmatpush1.xpose.msra.mxu0 0.0
      %416 = vmatprep.subr.mxu0 0.0
      %417 = vmatpush1.xpose.msra.mxu0 0.0
      %418 = vmatprep.subr.mxu0 0.0
      %419 = vmatpush1.xpose.msra.mxu0 0.0
      %420 = vmatprep.subr.mxu0 0.0
      %421 = vmatpush1.xpose.msra.mxu0 0.0
      %422 = vmatprep.subr.mxu0 0.0
      %423 = vmatpush1.xpose.msra.mxu0 0.0
      %424 = vmatprep.subr.mxu0 0.0
      %425 = vmatpush1.xpose.msra.mxu0 0.0
      %426 = vmatprep.subr.mxu0 0.0
      %427 = vmatpush1.xpose.msra.mxu0 0.0
      %428 = vmatprep.subr.mxu0 0.0
      %429 = vmatpush1.xpose.msra.mxu0 0.0
      %430 = vmatprep.subr.mxu0 0.0
      %431 = vmatpush1.xpose.msra.mxu0 0.0
      %432 = vmatprep.subr.mxu0 0.0
      %433 = vmatpush1.xpose.msra.mxu0 0.0
      %434 = vmatprep.subr.mxu0 0.0
      %435 = vmatpush1.xpose.msra.mxu0 0.0
      %436 = vmatprep.subr.mxu0 0.0
      %437 = vmatpush1.xpose.msra.mxu0 0.0
      %438 = vmatprep.subr.mxu0 0.0
      %439 = vmatpush1.xpose.msra.mxu0 0.0
      %440 = vmatprep.subr.mxu0 0.0
      %441 = vmatpush1.xpose.msra.mxu0 0.0
      %442 = vmatprep.subr.mxu0 0.0
      %443 = vmatpush1.xpose.msra.mxu0 0.0
      %444 = vmatprep.subr.mxu0 0.0
      %445 = vmatpush1.xpose.msra.mxu0 0.0
      %446 = vmatprep.subr.mxu0 0.0
      %447 = vmatpush1.xpose.msra.mxu0 0.0
      %448 = vmatprep.subr.mxu0 0.0
      %449 = vmatpush1.xpose.msra.mxu0 0.0
      %450 = vmatprep.mubr.f32.mxu0 0.0
      %451 = vmatmul.mubr.f32.gmra.mrb[0].mxu0 %v381
      %v452 = vpop.f32.mrb[0].mxu0
      %v453 = vadd.f32 0.0, %v452
      %v454 = vpop.f32.mrb[0].mxu0
      %455 = vdwg.mxu0
      %v457 = vsel %vm227, %v218, 0
      %v460 = vsel %vm227, %v222, 0
      %462 = vmatprep.subr.mxu0 0.0
      %463 = vmatpush1.xpose.msra.mxu0 %v460
      %464 = vmatprep.subr.mxu0 0.0
      %465 = vmatpush1.xpose.msra.mxu0 0.0
      %466 = vmatprep.subr.mxu0 0.0
      %467 = vmatpush1.xpose.msra.mxu0 0.0
      %468 = vmatprep.subr.mxu0 0.0
      %469 = vmatpush1.xpose.msra.mxu0 0.0
      %470 = vmatprep.subr.mxu0 0.0
      %471 = vmatpush1.xpose.msra.mxu0 0.0
      %472 = vmatprep.subr.mxu0 0.0
      %473 = vmatpush1.xpose.msra.mxu0 0.0
      %474 = vmatprep.subr.mxu0 0.0
      %475 = vmatpush1.xpose.msra.mxu0 0.0
      %476 = vmatprep.subr.mxu0 0.0
      %477 = vmatpush1.xpose.msra.mxu0 0.0
      %478 = vmatprep.subr.mxu0 0.0
      %479 = vmatpush1.xpose.msra.mxu0 0.0
      %480 = vmatprep.subr.mxu0 0.0
      %481 = vmatpush1.xpose.msra.mxu0 0.0
      %482 = vmatprep.subr.mxu0 0.0
      %483 = vmatpush1.xpose.msra.mxu0 0.0
      %484 = vmatprep.subr.mxu0 0.0
      %485 = vmatpush1.xpose.msra.mxu0 0.0
      %486 = vmatprep.subr.mxu0 0.0
      %487 = vmatpush1.xpose.msra.mxu0 0.0
      %488 = vmatprep.subr.mxu0 0.0
      %489 = vmatpush1.xpose.msra.mxu0 0.0
      %490 = vmatprep.subr.mxu0 0.0
      %491 = vmatpush1.xpose.msra.mxu0 0.0
      %492 = vmatprep.subr.mxu0 0.0
      %493 = vmatpush1.xpose.msra.mxu0 0.0
      %494 = vmatprep.subr.mxu0 0.0
      %495 = vmatpush1.xpose.msra.mxu0 0.0
      %496 = vmatprep.subr.mxu0 0.0
      %497 = vmatpush1.xpose.msra.mxu0 0.0
      %498 = vmatprep.subr.mxu0 0.0
      %499 = vmatpush1.xpose.msra.mxu0 0.0
      %500 = vmatprep.subr.mxu0 0.0
      %501 = vmatpush1.xpose.msra.mxu0 0.0
      %502 = vmatprep.subr.mxu0 0.0
      %503 = vmatpush1.xpose.msra.mxu0 0.0
      %504 = vmatprep.subr.mxu0 0.0
      %505 = vmatpush1.xpose.msra.mxu0 0.0
      %506 = vmatprep.subr.mxu0 0.0
      %507 = vmatpush1.xpose.msra.mxu0 0.0
      %508 = vmatprep.subr.mxu0 0.0
      %509 = vmatpush1.xpose.msra.mxu0 0.0
      %510 = vmatprep.subr.mxu0 0.0
      %511 = vmatpush1.xpose.msra.mxu0 0.0
      %512 = vmatprep.subr.mxu0 0.0
      %513 = vmatpush1.xpose.msra.mxu0 0.0
      %514 = vmatprep.subr.mxu0 0.0
      %515 = vmatpush1.xpose.msra.mxu0 0.0
      %516 = vmatprep.subr.mxu0 0.0
      %517 = vmatpush1.xpose.msra.mxu0 0.0
      %518 = vmatprep.subr.mxu0 0.0
      %519 = vmatpush1.xpose.msra.mxu0 0.0
      %520 = vmatprep.subr.mxu0 0.0
      %521 = vmatpush1.xpose.msra.mxu0 0.0
      %522 = vmatprep.subr.mxu0 0.0
      %523 = vmatpush1.xpose.msra.mxu0 0.0
      %524 = vmatprep.subr.mxu0 0.0
      %525 = vmatpush1.xpose.msra.mxu0 0.0
      %526 = vmatprep.mubr.f32.mxu0 0.0
      %527 = vmatmul.mubr.f32.gmra.mrb[0].mxu0 %v457
      %v528 = vpop.f32.mrb[0].mxu0
      %v529 = vadd.f32 0.0, %v528
      %v530 = vpop.f32.mrb[0].mxu0
      %531 = vdwg.mxu0
      %v532 = vsel %vm227, %v301, -inf
      %533 = vmax.xlane.f32.xlu0 %v532
      %v534 = vpop.xlane.xlu0 %533
      %v535 = vsel %vm227, %v377, -inf
      %536 = vmax.xlane.f32.xlu0 %v535
      %v537 = vpop.xlane.xlu0 %536
      %v538 = vsel %vm227, %v453, -inf
      %539 = vmax.xlane.f32.xlu0 %v538
      %v540 = vpop.xlane.xlu0 %539
      %v541 = vsel %vm227, %v529, -inf
      %542 = vmax.xlane.f32.xlu0 %v541
      %v543 = vpop.xlane.xlu0 %542
      %v544 = vsub.f32 %v301, %v534
      %v545 = vsub.f32 %v377, %v537
      %v546 = vsub.f32 %v453, %v540
      %v547 = vsub.f32 %v529, %v543
      %v548 = vmul.f32 %v544, 1.442695
      %v549 = vpow.pop %v548
      %v550 = vmul.f32 %v545, 1.442695
      %v551 = vpow.pop %v550
      %v552 = vmul.f32 %v546, 1.442695
      %v553 = vpow.pop %v552
      %v554 = vmul.f32 %v547, 1.442695
      %v555 = vpow.pop %v554
      %v556 = vsel %vm227, %v549, 0.0
      %557 = vadd.xlane.f32.xlu0 %v556
      %v558 = vpop.xlane.xlu0 %557
      %v559 = vsel %vm227, %v551, 0.0
      %560 = vadd.xlane.f32.xlu0 %v559
      %v561 = vpop.xlane.xlu0 %560
      %v562 = vsel %vm227, %v553, 0.0
      %563 = vadd.xlane.f32.xlu0 %v562
      %v564 = vpop.xlane.xlu0 %563
      %v565 = vsel %vm227, %v555, 0.0
      %566 = vadd.xlane.f32.xlu0 %v565
      %v567 = vpop.xlane.xlu0 %566
      %v568 = vrcp.pop %v558
      %v569 = vrcp.pop %v561
      %v570 = vrcp.pop %v564
      %v571 = vrcp.pop %v567
      %v572 = vmul.f32 %v549, %v568
      %v573 = vmul.f32 %v551, %v569
      %v574 = vmul.f32 %v553, %v570
      %v575 = vmul.f32 %v555, %v571
      %v577 = vsel %vm227, %v572, 0
      %579 = vmatprep.subr.mxu0 0.0
      %580 = vmatpush1.msra.mxu0 %v223
      %581 = vmatprep.subr.mxu0 0.0
      %582 = vmatpush1.msra.mxu0 0.0
      %583 = vmatprep.subr.mxu0 0.0
      %584 = vmatpush1.msra.mxu0 0.0
      %585 = vmatprep.subr.mxu0 0.0
      %586 = vmatpush1.msra.mxu0 0.0
      %587 = vmatprep.subr.mxu0 0.0
      %588 = vmatpush1.msra.mxu0 0.0
      %589 = vmatprep.subr.mxu0 0.0
      %590 = vmatpush1.msra.mxu0 0.0
      %591 = vmatprep.subr.mxu0 0.0
      %592 = vmatpush1.msra.mxu0 0.0
      %593 = vmatprep.subr.mxu0 0.0
      %594 = vmatpush1.msra.mxu0 0.0
      %595 = vmatprep.subr.mxu0 0.0
      %596 = vmatpush1.msra.mxu0 0.0
      %597 = vmatprep.subr.mxu0 0.0
      %598 = vmatpush1.msra.mxu0 0.0
      %599 = vmatprep.subr.mxu0 0.0
      %600 = vmatpush1.msra.mxu0 0.0
      %601 = vmatprep.subr.mxu0 0.0
      %602 = vmatpush1.msra.mxu0 0.0
      %603 = vmatprep.subr.mxu0 0.0
      %604 = vmatpush1.msra.mxu0 0.0
      %605 = vmatprep.subr.mxu0 0.0
      %606 = vmatpush1.msra.mxu0 0.0
      %607 = vmatprep.subr.mxu0 0.0
      %608 = vmatpush1.msra.mxu0 0.0
      %609 = vmatprep.subr.mxu0 0.0
      %610 = vmatpush1.msra.mxu0 0.0
      %611 = vmatprep.subr.mxu0 0.0
      %612 = vmatpush1.msra.mxu0 0.0
      %613 = vmatprep.subr.mxu0 0.0
      %614 = vmatpush1.msra.mxu0 0.0
      %615 = vmatprep.subr.mxu0 0.0
      %616 = vmatpush1.msra.mxu0 0.0
      %617 = vmatprep.subr.mxu0 0.0
      %618 = vmatpush1.msra.mxu0 0.0
      %619 = vmatprep.subr.mxu0 0.0
      %620 = vmatpush1.msra.mxu0 0.0
      %621 = vmatprep.subr.mxu0 0.0
      %622 = vmatpush1.msra.mxu0 0.0
      %623 = vmatprep.subr.mxu0 0.0
      %624 = vmatpush1.msra.mxu0 0.0
      %625 = vmatprep.subr.mxu0 0.0
      %626 = vmatpush1.msra.mxu0 0.0
      %627 = vmatprep.subr.mxu0 0.0
      %628 = vmatpush1.msra.mxu0 0.0
      %629 = vmatprep.subr.mxu0 0.0
      %630 = vmatpush1.msra.mxu0 0.0
      %631 = vmatprep.subr.mxu0 0.0
      %632 = vmatpush1.msra.mxu0 0.0
      %633 = vmatprep.subr.mxu0 0.0
      %634 = vmatpush1.msra.mxu0 0.0
      %635 = vmatprep.subr.mxu0 0.0
      %636 = vmatpush1.msra.mxu0 0.0
      %637 = vmatprep.subr.mxu0 0.0
      %638 = vmatpush1.msra.mxu0 0.0
      %639 = vmatprep.subr.mxu0 0.0
      %640 = vmatpush1.msra.mxu0 0.0
      %641 = vmatprep.subr.mxu0 0.0
      %642 = vmatpush1.msra.mxu0 0.0
      %643 = vmatprep.mubr.f32.mxu0 0.0
      %644 = vmatmul.mubr.f32.gmra.mrb[0].mxu0 %v577
      %v645 = vpop.f32.mrb[0].mxu0
      %v646 = vadd.f32 0.0, %v645
      %v647 = vpop.f32.mrb[0].mxu0
      %648 = vdwg.mxu0
      %v650 = vsel %vm227, %v573, 0
      %652 = vmatprep.subr.mxu0 0.0
      %653 = vmatpush1.msra.mxu0 %v224
      %654 = vmatprep.subr.mxu0 0.0
      %655 = vmatpush1.msra.mxu0 0.0
      %656 = vmatprep.subr.mxu0 0.0
      %657 = vmatpush1.msra.mxu0 0.0
      %658 = vmatprep.subr.mxu0 0.0
      %659 = vmatpush1.msra.mxu0 0.0
      %660 = vmatprep.subr.mxu0 0.0
      %661 = vmatpush1.msra.mxu0 0.0
      %662 = vmatprep.subr.mxu0 0.0
      %663 = vmatpush1.msra.mxu0 0.0
      %664 = vmatprep.subr.mxu0 0.0
      %665 = vmatpush1.msra.mxu0 0.0
      %666 = vmatprep.subr.mxu0 0.0
      %667 = vmatpush1.msra.mxu0 0.0
      %668 = vmatprep.subr.mxu0 0.0
      %669 = vmatpush1.msra.mxu0 0.0
      %670 = vmatprep.subr.mxu0 0.0
      %671 = vmatpush1.msra.mxu0 0.0
      %672 = vmatprep.subr.mxu0 0.0
      %673 = vmatpush1.msra.mxu0 0.0
      %674 = vmatprep.subr.mxu0 0.0
      %675 = vmatpush1.msra.mxu0 0.0
      %676 = vmatprep.subr.mxu0 0.0
      %677 = vmatpush1.msra.mxu0 0.0
      %678 = vmatprep.subr.mxu0 0.0
      %679 = vmatpush1.msra.mxu0 0.0
      %680 = vmatprep.subr.mxu0 0.0
      %681 = vmatpush1.msra.mxu0 0.0
      %682 = vmatprep.subr.mxu0 0.0
      %683 = vmatpush1.msra.mxu0 0.0
      %684 = vmatprep.subr.mxu0 0.0
      %685 = vmatpush1.msra.mxu0 0.0
      %686 = vmatprep.subr.mxu0 0.0
      %687 = vmatpush1.msra.mxu0 0.0
      %688 = vmatprep.subr.mxu0 0.0
      %689 = vmatpush1.msra.mxu0 0.0
      %690 = vmatprep.subr.mxu0 0.0
      %691 = vmatpush1.msra.mxu0 0.0
      %692 = vmatprep.subr.mxu0 0.0
      %693 = vmatpush1.msra.mxu0 0.0
      %694 = vmatprep.subr.mxu0 0.0
      %695 = vmatpush1.msra.mxu0 0.0
      %696 = vmatprep.subr.mxu0 0.0
      %697 = vmatpush1.msra.mxu0 0.0
      %698 = vmatprep.subr.mxu0 0.0
      %699 = vmatpush1.msra.mxu0 0.0
      %700 = vmatprep.subr.mxu0 0.0
      %701 = vmatpush1.msra.mxu0 0.0
      %702 = vmatprep.subr.mxu0 0.0
      %703 = vmatpush1.msra.mxu0 0.0
      %704 = vmatprep.subr.mxu0 0.0
      %705 = vmatpush1.msra.mxu0 0.0
      %706 = vmatprep.subr.mxu0 0.0
      %707 = vmatpush1.msra.mxu0 0.0
      %708 = vmatprep.subr.mxu0 0.0
      %709 = vmatpush1.msra.mxu0 0.0
      %710 = vmatprep.subr.mxu0 0.0
      %711 = vmatpush1.msra.mxu0 0.0
      %712 = vmatprep.subr.mxu0 0.0
      %713 = vmatpush1.msra.mxu0 0.0
      %714 = vmatprep.subr.mxu0 0.0
      %715 = vmatpush1.msra.mxu0 0.0
      %716 = vmatprep.mubr.f32.mxu0 0.0
      %717 = vmatmul.mubr.f32.gmra.mrb[0].mxu0 %v650
      %v718 = vpop.f32.mrb[0].mxu0
      %v719 = vadd.f32 0.0, %v718
      %v720 = vpop.f32.mrb[0].mxu0
      %721 = vdwg.mxu0
      %v723 = vsel %vm227, %v574, 0
      %725 = vmatprep.subr.mxu0 0.0
      %726 = vmatpush1.msra.mxu0 %v225
      %727 = vmatprep.subr.mxu0 0.0
      %728 = vmatpush1.msra.mxu0 0.0
      %729 = vmatprep.subr.mxu0 0.0
      %730 = vmatpush1.msra.mxu0 0.0
      %731 = vmatprep.subr.mxu0 0.0
      %732 = vmatpush1.msra.mxu0 0.0
      %733 = vmatprep.subr.mxu0 0.0
      %734 = vmatpush1.msra.mxu0 0.0
      %735 = vmatprep.subr.mxu0 0.0
      %736 = vmatpush1.msra.mxu0 0.0
      %737 = vmatprep.subr.mxu0 0.0
      %738 = vmatpush1.msra.mxu0 0.0
      %739 = vmatprep.subr.mxu0 0.0
      %740 = vmatpush1.msra.mxu0 0.0
      %741 = vmatprep.subr.mxu0 0.0
      %742 = vmatpush1.msra.mxu0 0.0
      %743 = vmatprep.subr.mxu0 0.0
      %744 = vmatpush1.msra.mxu0 0.0
      %745 = vmatprep.subr.mxu0 0.0
      %746 = vmatpush1.msra.mxu0 0.0
      %747 = vmatprep.subr.mxu0 0.0
      %748 = vmatpush1.msra.mxu0 0.0
      %749 = vmatprep.subr.mxu0 0.0
      %750 = vmatpush1.msra.mxu0 0.0
      %751 = vmatprep.subr.mxu0 0.0
      %752 = vmatpush1.msra.mxu0 0.0
      %753 = vmatprep.subr.mxu0 0.0
      %754 = vmatpush1.msra.mxu0 0.0
      %755 = vmatprep.subr.mxu0 0.0
      %756 = vmatpush1.msra.mxu0 0.0
      %757 = vmatprep.subr.mxu0 0.0
      %758 = vmatpush1.msra.mxu0 0.0
      %759 = vmatprep.subr.mxu0 0.0
      %760 = vmatpush1.msra.mxu0 0.0
      %761 = vmatprep.subr.mxu0 0.0
      %762 = vmatpush1.msra.mxu0 0.0
      %763 = vmatprep.subr.mxu0 0.0
      %764 = vmatpush1.msra.mxu0 0.0
      %765 = vmatprep.subr.mxu0 0.0
      %766 = vmatpush1.msra.mxu0 0.0
      %767 = vmatprep.subr.mxu0 0.0
      %768 = vmatpush1.msra.mxu0 0.0
      %769 = vmatprep.subr.mxu0 0.0
      %770 = vmatpush1.msra.mxu0 0.0
      %771 = vmatprep.subr.mxu0 0.0
      %772 = vmatpush1.msra.mxu0 0.0
      %773 = vmatprep.subr.mxu0 0.0
      %774 = vmatpush1.msra.mxu0 0.0
      %775 = vmatprep.subr.mxu0 0.0
      %776 = vmatpush1.msra.mxu0 0.0
      %777 = vmatprep.subr.mxu0 0.0
      %778 = vmatpush1.msra.mxu0 0.0
      %779 = vmatprep.subr.mxu0 0.0
      %780 = vmatpush1.msra.mxu0 0.0
      %781 = vmatprep.subr.mxu0 0.0
      %782 = vmatpush1.msra.mxu0 0.0
      %783 = vmatprep.subr.mxu0 0.0
      %784 = vmatpush1.msra.mxu0 0.0
      %785 = vmatprep.subr.mxu0 0.0
      %786 = vmatpush1.msra.mxu0 0.0
      %787 = vmatprep.subr.mxu0 0.0
      %788 = vmatpush1.msra.mxu0 0.0
      %789 = vmatprep.mubr.f32.mxu0 0.0
      %790 = vmatmul.mubr.f32.gmra.mrb[0].mxu0 %v723
      %v791 = vpop.f32.mrb[0].mxu0
      %v792 = vadd.f32 0.0, %v791
      %v793 = vpop.f32.mrb[0].mxu0
      %794 = vdwg.mxu0
      %v796 = vsel %vm227, %v575, 0
      %798 = vmatprep.subr.mxu0 0.0
      %799 = vmatpush1.msra.mxu0 %v226
      %800 = vmatprep.subr.mxu0 0.0
      %801 = vmatpush1.msra.mxu0 0.0
      %802 = vmatprep.subr.mxu0 0.0
      %803 = vmatpush1.msra.mxu0 0.0
      %804 = vmatprep.subr.mxu0 0.0
      %805 = vmatpush1.msra.mxu0 0.0
      %806 = vmatprep.subr.mxu0 0.0
      %807 = vmatpush1.msra.mxu0 0.0
      %808 = vmatprep.subr.mxu0 0.0
      %809 = vmatpush1.msra.mxu0 0.0
      %810 = vmatprep.subr.mxu0 0.0
      %811 = vmatpush1.msra.mxu0 0.0
      %812 = vmatprep.subr.mxu0 0.0
      %813 = vmatpush1.msra.mxu0 0.0
      %814 = vmatprep.subr.mxu0 0.0
      %815 = vmatpush1.msra.mxu0 0.0
      %816 = vmatprep.subr.mxu0 0.0
      %817 = vmatpush1.msra.mxu0 0.0
      %818 = vmatprep.subr.mxu0 0.0
      %819 = vmatpush1.msra.mxu0 0.0
      %820 = vmatprep.subr.mxu0 0.0
      %821 = vmatpush1.msra.mxu0 0.0
      %822 = vmatprep.subr.mxu0 0.0
      %823 = vmatpush1.msra.mxu0 0.0
      %824 = vmatprep.subr.mxu0 0.0
      %825 = vmatpush1.msra.mxu0 0.0
      %826 = vmatprep.subr.mxu0 0.0
      %827 = vmatpush1.msra.mxu0 0.0
      %828 = vmatprep.subr.mxu0 0.0
      %829 = vmatpush1.msra.mxu0 0.0
      %830 = vmatprep.subr.mxu0 0.0
      %831 = vmatpush1.msra.mxu0 0.0
      %832 = vmatprep.subr.mxu0 0.0
      %833 = vmatpush1.msra.mxu0 0.0
      %834 = vmatprep.subr.mxu0 0.0
      %835 = vmatpush1.msra.mxu0 0.0
      %836 = vmatprep.subr.mxu0 0.0
      %837 = vmatpush1.msra.mxu0 0.0
      %838 = vmatprep.subr.mxu0 0.0
      %839 = vmatpush1.msra.mxu0 0.0
      %840 = vmatprep.subr.mxu0 0.0
      %841 = vmatpush1.msra.mxu0 0.0
      %842 = vmatprep.subr.mxu0 0.0
      %843 = vmatpush1.msra.mxu0 0.0
      %844 = vmatprep.subr.mxu0 0.0
      %845 = vmatpush1.msra.mxu0 0.0
      %846 = vmatprep.subr.mxu0 0.0
      %847 = vmatpush1.msra.mxu0 0.0
      %848 = vmatprep.subr.mxu0 0.0
      %849 = vmatpush1.msra.mxu0 0.0
      %850 = vmatprep.subr.mxu0 0.0
      %851 = vmatpush1.msra.mxu0 0.0
      %852 = vmatprep.subr.mxu0 0.0
      %853 = vmatpush1.msra.mxu0 0.0
      %854 = vmatprep.subr.mxu0 0.0
      %855 = vmatpush1.msra.mxu0 0.0
      %856 = vmatprep.subr.mxu0 0.0
      %857 = vmatpush1.msra.mxu0 0.0
      %858 = vmatprep.subr.mxu0 0.0
      %859 = vmatpush1.msra.mxu0 0.0
      %860 = vmatprep.subr.mxu0 0.0
      %861 = vmatpush1.msra.mxu0 0.0
      %862 = vmatprep.mubr.f32.mxu0 0.0
      %863 = vmatmul.mubr.f32.gmra.mrb[0].mxu0 %v796
      %v864 = vpop.f32.mrb[0].mxu0
      %v865 = vadd.f32 0.0, %v864
      %v866 = vpop.f32.mrb[0].mxu0
      %867 = vdwg.mxu0
      %868 = vst.msk [vmem:[%s210] sm:$0xff] %vm227, %v646
      %869 = vst.msk [vmem:[%s210 + $0x8] sm:$0xff] %vm227, %v719
      %870 = vst.msk [vmem:[%s210 + $0x10] sm:$0xff] %vm227, %v792
      %871 = vst.msk [vmem:[%s210 + $0x18] sm:$0xff] %vm227, %v865
      %p872 = scmp.lt.s32.totalorder %s14, 1
      %s873 = scalar_select %p872, %s14, 1
      %s874 = smul.addr %s873, 4
      %s875 = smul.addr %s874, 8
      %s876 = scalar_lea.vmem %s3, %s875
      // Predicated region
      $region33: #{encoder_forward.16} parent=31 // pred_check
        %p877 = pneg %p110
      $region34: #{encoder_forward.16} parent=31 // pred_check_branch
        %879 = sbr.rel (%p877) target = $region36
      $region35: #{encoder_forward.16} parent=31 // pred_region
        _
      $region36: #{encoder_forward.16} parent=31 // pred_fallthru
        _
    $region32: #{encoder_forward.16} parent=5 // pred_fallthru
      _
    %p880 = scmp.le.s32.totalorder 2, %s9
    // Predicated region
    $region37: #{encoder_forward.16} parent=5 // pred_check
      %p881 = pneg %p880
    $region38: #{encoder_forward.16} parent=5 // pred_check_branch
      %883 = sbr.rel (%p881) target = $region40
    $region39: #{encoder_forward.16} parent=5 // pred_region
      %s884 = ssub.s32 %s9, 2
      // Predicated region
      $region41: #{encoder_forward.16} parent=39 // pred_check
        %p885 = pneg %p116
      $region42: #{encoder_forward.16} parent=39 // pred_check_branch
        %887 = sbr.rel (%p885) target = $region44
      $region43: #{encoder_forward.16} parent=39 // pred_region
        %p888 = scmp.lt.s32.totalorder %s15, 1
        %s889 = scalar_select %p888, %s15, 1
        %s890 = smul.addr %s889, 4
        %s891 = smul.addr %s890, 8
        %s892 = scalar_lea.vmem %s3, %s891
      $region44: #{encoder_forward.16} parent=39 // pred_fallthru
        _
    $region40: #{encoder_forward.16} parent=5 // pred_fallthru
      _
  $region6: #{encoder_forward.16} parent=0 // loop_footer
    %s13 = sadd.s32 1, %s9
  $region7: #{encoder_forward.16} parent=0 // loop_footer_branch
    %8 = sbr.rel target = $region3
  $region8: #{encoder_forward.16} parent=0 // loop_exit
    _

// kernel: encoder_forward.19
$region0: #{encoder_forward.19}
  #allocation0 [shape = 'u32[]', space=smem, size = 0x4, offset = 0x4, fixed_abs, tag = 'smem constant byte address 0x4 - core index']
  #allocation1 [shape = 'u32[144,128]{1,0:T(1,128)}', space=vmem, size = 0x12000, scoped, tag = 'internal scratch']
  %s0 = inlined_call_operand.vmem [shape: f32[16,32], index: 0, kind: input, shape index: {}]
  %s1 = inlined_call_operand.vmem [shape: f32[32,64], index: 1, kind: input, shape index: {}]
  %s2 = inlined_call_operand.vmem [shape: f32[1,64], index: 2, kind: input, shape index: {}]
  %s3 = inlined_call_operand.vmem [shape: f32[16,64], index: 3, kind: output, shape index: {}]
  %s4 = sld [smem:[#allocation0]]
  $region22: #{encoder_forward.19} parent=0
    _
  %s6 = ssub.s32 1, %s4
  %s7 = scalar_select 0, %s6, %s4
  // Predicated region
  $region2: #{encoder_forward.19} parent=0 // pred_check
    _
  $region3: #{encoder_forward.19} parent=0 // pred_check_branch
    %9 = sbr.rel (0) target = $region5
  $region4: #{encoder_forward.19} parent=0 // pred_region
    _
  $region5: #{encoder_forward.19} parent=0 // pred_fallthru
    _
  // Predicated region
  $region6: #{encoder_forward.19} parent=0 // pred_check
    _
  $region7: #{encoder_forward.19} parent=0 // pred_check_branch
    %11 = sbr.rel (0) target = $region9
  $region8: #{encoder_forward.19} parent=0 // pred_region
    _
  $region9: #{encoder_forward.19} parent=0 // pred_fallthru
    _
  // Predicated region
  $region10: #{encoder_forward.19} parent=0 // pred_check
    _
  $region11: #{encoder_forward.19} parent=0 // pred_check_branch
    %13 = sbr.rel (0) target = $region13
  $region12: #{encoder_forward.19} parent=0 // pred_region
    _
  $region13: #{encoder_forward.19} parent=0 // pred_fallthru
    _
  %v14 = vld [vmem:[%s0] sm:$0xff]
  %v15 = vld [vmem:[%s0 + $0x8] sm:$0xff]
  %v16 = vld [vmem:[%s1] sm:$0xff]
  %v17 = vld [vmem:[%s1 + $0x8] sm:$0xff]
  %v18 = vld [vmem:[%s1 + $0x10] sm:$0xff]
  %v19 = vld [vmem:[%s1 + $0x18] sm:$0xff]
  %v20 = vld [vmem:[%s2] sm:$0x1]
  %v22 = vlaneseq
  %v23 = vshrl.u32 %v22, 7
  %v24 = vsub.s32 0, %v23
  %v25 = vrot.slane %v20, %v24
  %vm27 = vcmask 261120
  %v29 = vsel %vm27, %v14, 0
  %v32 = vsel %vm27, %v15, 0
  %34 = vmatprep.subr.mxu0 0.0
  %35 = vmatpush1.msra.mxu0 %v16
  %36 = vmatprep.subr.mxu0 0.0
  %37 = vmatpush1.msra.mxu0 %v17
  %38 = vmatprep.subr.mxu0 0.0
  %39 = vmatpush1.msra.mxu0 %v18
  %40 = vmatprep.subr.mxu0 0.0
  %41 = vmatpush1.msra.mxu0 %v19
  %42 = vmatprep.subr.mxu0 0.0
  %43 = vmatpush1.msra.mxu0 0.0
  %44 = vmatprep.subr.mxu0 0.0
  %45 = vmatpush1.msra.mxu0 0.0
  %46 = vmatprep.subr.mxu0 0.0
  %47 = vmatpush1.msra.mxu0 0.0
  %48 = vmatprep.subr.mxu0 0.0
  %49 = vmatpush1.msra.mxu0 0.0
  %50 = vmatprep.subr.mxu0 0.0
  %51 = vmatpush1.msra.mxu0 0.0
  %52 = vmatprep.subr.mxu0 0.0
  %53 = vmatpush1.msra.mxu0 0.0
  %54 = vmatprep.subr.mxu0 0.0
  %55 = vmatpush1.msra.mxu0 0.0
  %56 = vmatprep.subr.mxu0 0.0
  %57 = vmatpush1.msra.mxu0 0.0
  %58 = vmatprep.subr.mxu0 0.0
  %59 = vmatpush1.msra.mxu0 0.0
  %60 = vmatprep.subr.mxu0 0.0
  %61 = vmatpush1.msra.mxu0 0.0
  %62 = vmatprep.subr.mxu0 0.0
  %63 = vmatpush1.msra.mxu0 0.0
  %64 = vmatprep.subr.mxu0 0.0
  %65 = vmatpush1.msra.mxu0 0.0
  %66 = vmatprep.subr.mxu0 0.0
  %67 = vmatpush1.msra.mxu0 0.0
  %68 = vmatprep.subr.mxu0 0.0
  %69 = vmatpush1.msra.mxu0 0.0
  %70 = vmatprep.subr.mxu0 0.0
  %71 = vmatpush1.msra.mxu0 0.0
  %72 = vmatprep.subr.mxu0 0.0
  %73 = vmatpush1.msra.mxu0 0.0
  %74 = vmatprep.subr.mxu0 0.0
  %75 = vmatpush1.msra.mxu0 0.0
  %76 = vmatprep.subr.mxu0 0.0
  %77 = vmatpush1.msra.mxu0 0.0
  %78 = vmatprep.subr.mxu0 0.0
  %79 = vmatpush1.msra.mxu0 0.0
  %80 = vmatprep.subr.mxu0 0.0
  %81 = vmatpush1.msra.mxu0 0.0
  %82 = vmatprep.subr.mxu0 0.0
  %83 = vmatpush1.msra.mxu0 0.0
  %84 = vmatprep.subr.mxu0 0.0
  %85 = vmatpush1.msra.mxu0 0.0
  %86 = vmatprep.subr.mxu0 0.0
  %87 = vmatpush1.msra.mxu0 0.0
  %88 = vmatprep.subr.mxu0 0.0
  %89 = vmatpush1.msra.mxu0 0.0
  %90 = vmatprep.subr.mxu0 0.0
  %91 = vmatpush1.msra.mxu0 0.0
  %92 = vmatprep.subr.mxu0 0.0
  %93 = vmatpush1.msra.mxu0 0.0
  %94 = vmatprep.subr.mxu0 0.0
  %95 = vmatpush1.msra.mxu0 0.0
  %96 = vmatprep.subr.mxu0 0.0
  %97 = vmatpush1.msra.mxu0 0.0
  %98 = vmatprep.mubr.f32.mxu0 0.0
  %99 = vmatmul.mubr.f32.gmra.mrb[0].mxu0 %v29
  %v100 = vpop.f32.mrb[0].mxu0
  %v101 = vadd.f32 %v25, %v100
  %v102 = vpop.f32.mrb[0].mxu0
  %103 = vmatprep.mubr.f32.mxu0 0.0
  %104 = vmatmul.mubr.f32.gmra.mrb[0].mxu0 %v32
  %v105 = vpop.f32.mrb[0].mxu0
  %v106 = vadd.f32 %v25, %v105
  %v107 = vpop.f32.mrb[0].mxu0
  %108 = vdwg.mxu0
  %v109 = vmax.f32 %v101, 0.0
  %v110 = vmax.f32 %v106, 0.0
  %vm111 = vcmask 523264
  %112 = vst.msk [vmem:[%s3] sm:$0xff] %vm111, %v109
  %113 = vst.msk [vmem:[%s3 + $0x8] sm:$0xff] %vm111, %v110
  // Predicated region
  $region14: #{encoder_forward.19} parent=0 // pred_check
    _
  $region15: #{encoder_forward.19} parent=0 // pred_check_branch
    %115 = sbr.rel (0) target = $region17
  $region16: #{encoder_forward.19} parent=0 // pred_region
    _
  $region17: #{encoder_forward.19} parent=0 // pred_fallthru
    _
  // Predicated region
  $region18: #{encoder_forward.19} parent=0 // pred_check
    _
  $region19: #{encoder_forward.19} parent=0 // pred_check_branch
    %117 = sbr.rel (0) target = $region21
  $region20: #{encoder_forward.19} parent=0 // pred_region
    _
  $region21: #{encoder_forward.19} parent=0 // pred_fallthru
    _

// kernel: encoder_forward.20
$region0: #{encoder_forward.20}
  #allocation0 [shape = 'u32[]', space=smem, size = 0x4, offset = 0x4, fixed_abs, tag = 'smem constant byte address 0x4 - core index']
  #allocation1 [shape = 'u32[144,128]{1,0:T(1,128)}', space=vmem, size = 0x12000, scoped, tag = 'internal scratch']
  %s0 = inlined_call_operand.vmem [shape: f32[16,64], index: 0, kind: input, shape index: {}]
  %s1 = inlined_call_operand.vmem [shape: f32[64,32], index: 1, kind: input, shape index: {}]
  %s2 = inlined_call_operand.vmem [shape: f32[1,32], index: 2, kind: input, shape index: {}]
  %s3 = inlined_call_operand.vmem [shape: f32[16,32], index: 3, kind: output, shape index: {}]
  %s4 = sld [smem:[#allocation0]]
  $region22: #{encoder_forward.20} parent=0
    _
  %s6 = ssub.s32 1, %s4
  %s7 = scalar_select 0, %s6, %s4
  // Predicated region
  $region2: #{encoder_forward.20} parent=0 // pred_check
    _
  $region3: #{encoder_forward.20} parent=0 // pred_check_branch
    %9 = sbr.rel (0) target = $region5
  $region4: #{encoder_forward.20} parent=0 // pred_region
    _
  $region5: #{encoder_forward.20} parent=0 // pred_fallthru
    _
  // Predicated region
  $region6: #{encoder_forward.20} parent=0 // pred_check
    _
  $region7: #{encoder_forward.20} parent=0 // pred_check_branch
    %11 = sbr.rel (0) target = $region9
  $region8: #{encoder_forward.20} parent=0 // pred_region
    _
  $region9: #{encoder_forward.20} parent=0 // pred_fallthru
    _
  // Predicated region
  $region10: #{encoder_forward.20} parent=0 // pred_check
    _
  $region11: #{encoder_forward.20} parent=0 // pred_check_branch
    %13 = sbr.rel (0) target = $region13
  $region12: #{encoder_forward.20} parent=0 // pred_region
    _
  $region13: #{encoder_forward.20} parent=0 // pred_fallthru
    _
  %v14 = vld [vmem:[%s0] sm:$0xff]
  %v15 = vld [vmem:[%s0 + $0x8] sm:$0xff]
  %v16 = vld [vmem:[%s1] sm:$0xff]
  %v17 = vld [vmem:[%s1 + $0x8] sm:$0xff]
  %v18 = vld [vmem:[%s1 + $0x10] sm:$0xff]
  %v19 = vld [vmem:[%s1 + $0x18] sm:$0xff]
  %v20 = vld [vmem:[%s1 + $0x20] sm:$0xff]
  %v21 = vld [vmem:[%s1 + $0x28] sm:$0xff]
  %v22 = vld [vmem:[%s1 + $0x30] sm:$0xff]
  %v23 = vld [vmem:[%s1 + $0x38] sm:$0xff]
  %v24 = vld [vmem:[%s2] sm:$0x1]
  %v26 = vlaneseq
  %v27 = vshrl.u32 %v26, 7
  %v28 = vsub.s32 0, %v27
  %v29 = vrot.slane %v24, %v28
  %vm31 = vcmask 523264
  %v33 = vsel %vm31, %v14, 0
  %v36 = vsel %vm31, %v15, 0
  %38 = vmatprep.subr.mxu0 0.0
  %39 = vmatpush1.msra.mxu0 %v16
  %40 = vmatprep.subr.mxu0 0.0
  %41 = vmatpush1.msra.mxu0 %v17
  %42 = vmatprep.subr.mxu0 0.0
  %43 = vmatpush1.msra.mxu0 %v18
  %44 = vmatprep.subr.mxu0 0.0
  %45 = vmatpush1.msra.mxu0 %v19
  %46 = vmatprep.subr.mxu0 0.0
  %47 = vmatpush1.msra.mxu0 %v20
  %48 = vmatprep.subr.mxu0 0.0
  %49 = vmatpush1.msra.mxu0 %v21
  %50 = vmatprep.subr.mxu0 0.0
  %51 = vmatpush1.msra.mxu0 %v22
  %52 = vmatprep.subr.mxu0 0.0
  %53 = vmatpush1.msra.mxu0 %v23
  %54 = vmatprep.subr.mxu0 0.0
  %55 = vmatpush1.msra.mxu0 0.0
  %56 = vmatprep.subr.mxu0 0.0
  %57 = vmatpush1.msra.mxu0 0.0
  %58 = vmatprep.subr.mxu0 0.0
  %59 = vmatpush1.msra.mxu0 0.0
  %60 = vmatprep.subr.mxu0 0.0
  %61 = vmatpush1.msra.mxu0 0.0
  %62 = vmatprep.subr.mxu0 0.0
  %63 = vmatpush1.msra.mxu0 0.0
  %64 = vmatprep.subr.mxu0 0.0
  %65 = vmatpush1.msra.mxu0 0.0
  %66 = vmatprep.subr.mxu0 0.0
  %67 = vmatpush1.msra.mxu0 0.0
  %68 = vmatprep.subr.mxu0 0.0
  %69 = vmatpush1.msra.mxu0 0.0
  %70 = vmatprep.subr.mxu0 0.0
  %71 = vmatpush1.msra.mxu0 0.0
  %72 = vmatprep.subr.mxu0 0.0
  %73 = vmatpush1.msra.mxu0 0.0
  %74 = vmatprep.subr.mxu0 0.0
  %75 = vmatpush1.msra.mxu0 0.0
  %76 = vmatprep.subr.mxu0 0.0
  %77 = vmatpush1.msra.mxu0 0.0
  %78 = vmatprep.subr.mxu0 0.0
  %79 = vmatpush1.msra.mxu0 0.0
  %80 = vmatprep.subr.mxu0 0.0
  %81 = vmatpush1.msra.mxu0 0.0
  %82 = vmatprep.subr.mxu0 0.0
  %83 = vmatpush1.msra.mxu0 0.0
  %84 = vmatprep.subr.mxu0 0.0
  %85 = vmatpush1.msra.mxu0 0.0
  %86 = vmatprep.subr.mxu0 0.0
  %87 = vmatpush1.msra.mxu0 0.0
  %88 = vmatprep.subr.mxu0 0.0
  %89 = vmatpush1.msra.mxu0 0.0
  %90 = vmatprep.subr.mxu0 0.0
  %91 = vmatpush1.msra.mxu0 0.0
  %92 = vmatprep.subr.mxu0 0.0
  %93 = vmatpush1.msra.mxu0 0.0
  %94 = vmatprep.subr.mxu0 0.0
  %95 = vmatpush1.msra.mxu0 0.0
  %96 = vmatprep.subr.mxu0 0.0
  %97 = vmatpush1.msra.mxu0 0.0
  %98 = vmatprep.subr.mxu0 0.0
  %99 = vmatpush1.msra.mxu0 0.0
  %100 = vmatprep.subr.mxu0 0.0
  %101 = vmatpush1.msra.mxu0 0.0
  %102 = vmatprep.mubr.f32.mxu0 0.0
  %103 = vmatmul.mubr.f32.gmra.mrb[0].mxu0 %v33
  %v104 = vpop.f32.mrb[0].mxu0
  %v105 = vadd.f32 %v29, %v104
  %v106 = vpop.f32.mrb[0].mxu0
  %107 = vmatprep.mubr.f32.mxu0 0.0
  %108 = vmatmul.mubr.f32.gmra.mrb[0].mxu0 %v36
  %v109 = vpop.f32.mrb[0].mxu0
  %v110 = vadd.f32 %v29, %v109
  %v111 = vpop.f32.mrb[0].mxu0
  %112 = vdwg.mxu0
  %vm113 = vcmask 261120
  %114 = vst.msk [vmem:[%s3] sm:$0xff] %vm113, %v105
  %115 = vst.msk [vmem:[%s3 + $0x8] sm:$0xff] %vm113, %v110
  // Predicated region
  $region14: #{encoder_forward.20} parent=0 // pred_check
    _
  $region15: #{encoder_forward.20} parent=0 // pred_check_branch
    %117 = sbr.rel (0) target = $region17
  $region16: #{encoder_forward.20} parent=0 // pred_region
    _
  $region17: #{encoder_forward.20} parent=0 // pred_fallthru
    _
  // Predicated region
  $region18: #{encoder_forward.20} parent=0 // pred_check
    _
  $region19: #{encoder_forward.20} parent=0 // pred_check_branch
    %119 = sbr.rel (0) target = $region21
  $region20: #{encoder_forward.20} parent=0 // pred_region
    _
  $region21: #{encoder_forward.20} parent=0 // pred_fallthru
    _

// kernel: encoder_forward.29
$region0: #{encoder_forward.29}
  #allocation0 [shape = 'u32[]', space=smem, size = 0x4, offset = 0x4, fixed_abs, tag = 'smem constant byte address 0x4 - core index']
  #allocation1 [shape = 'u32[144,128]{1,0:T(1,128)}', space=vmem, size = 0x12000, scoped, tag = 'internal scratch']
  %s0 = inlined_call_operand.vmem [shape: f32[16,32], index: 0, kind: input, shape index: {}]
  %s1 = inlined_call_operand.vmem [shape: f32[1,32], index: 1, kind: input, shape index: {}]
  %s2 = inlined_call_operand.vmem [shape: f32[1,32], index: 2, kind: input, shape index: {}]
  %s3 = inlined_call_operand.hbm [shape: f32[16,32], index: 3, kind: output, shape index: {}]
  %s4 = sld [smem:[#allocation0]]
  $region22: #{encoder_forward.29} parent=0
    _
  %s6 = ssub.s32 1, %s4
  %s7 = scalar_select 0, %s6, %s4
  $region1: #{encoder_forward.29} parent=0
    #allocation2 [shape = 'u8[8192]{0}', space=vmem, size = 0x2000, scoped, tag = 'output window, operand 0, single buffered']
    #allocation3 [shape = 's32[1]{0}', space=sflag, size = 0x4, scoped, tag = 'scoped memory for encoder_forward.29']
    %8 = vsyncpa [#allocation3], 0
    // Predicated region
    $region2: #{encoder_forward.29} parent=1 // pred_check
      _
    $region3: #{encoder_forward.29} parent=1 // pred_check_branch
      %10 = sbr.rel (0) target = $region5
    $region4: #{encoder_forward.29} parent=1 // pred_region
      _
    $region5: #{encoder_forward.29} parent=1 // pred_fallthru
      _
    // Predicated region
    $region6: #{encoder_forward.29} parent=1 // pred_check
      _
    $region7: #{encoder_forward.29} parent=1 // pred_check_branch
      %12 = sbr.rel (0) target = $region9
    $region8: #{encoder_forward.29} parent=1 // pred_region
      _
    $region9: #{encoder_forward.29} parent=1 // pred_fallthru
      _
    // Predicated region
    $region10: #{encoder_forward.29} parent=1 // pred_check
      _
    $region11: #{encoder_forward.29} parent=1 // pred_check_branch
      %14 = sbr.rel (0) target = $region13
    $region12: #{encoder_forward.29} parent=1 // pred_region
      _
    $region13: #{encoder_forward.29} parent=1 // pred_fallthru
      _
    %v15 = vld [vmem:[%s0] sm:$0xff]
    %v16 = vld [vmem:[%s0 + $0x8] sm:$0xff]
    %vm17 = vcmask 261120
    %v18 = vsel %vm17, %v15, 0.0
    %19 = vadd.xlane.f32.xlu0 %v18
    %v20 = vpop.xlane.xlu0 %19
    %v21 = vsel %vm17, %v16, 0.0
    %22 = vadd.xlane.f32.xlu0 %v21
    %v23 = vpop.xlane.xlu0 %22
    %v24 = vrcp.pop 32.0
    %v25 = vmul.f32 %v20, %v24
    %v26 = vmul.f32 %v23, %v24
    %v27 = vsub.f32 %v15, %v25
    %v28 = vsub.f32 %v16, %v26
    %v29 = vmul.f32 %v27, %v27
    %v30 = vmul.f32 %v28, %v28
    %v31 = vsel %vm17, %v29, 0.0
    %32 = vadd.xlane.f32.xlu0 %v31
    %v33 = vpop.xlane.xlu0 %32
    %v34 = vsel %vm17, %v30, 0.0
    %35 = vadd.xlane.f32.xlu0 %v34
    %v36 = vpop.xlane.xlu0 %35
    %v37 = vmul.f32 %v33, %v24
    %v38 = vmul.f32 %v36, %v24
    %v39 = vadd.f32 %v37, 1e-05
    %v40 = vadd.f32 %v38, 1e-05
    %v41 = vrsqrt.pop %v39
    %v42 = vrsqrt.pop %v40
    %v43 = vmul.f32 %v27, %v41
    %v44 = vmul.f32 %v28, %v42
    %v45 = vld [vmem:[%s1] sm:$0x1]
    %v47 = vlaneseq
    %v48 = vshrl.u32 %v47, 7
    %v49 = vsub.s32 0, %v48
    %v50 = vrot.slane %v45, %v49
    %v52 = vmul.f32 %v43, %v50
    %v53 = vmul.f32 %v44, %v50
    %v54 = vld [vmem:[%s2] sm:$0x1]
    %v56 = vlaneseq
    %v57 = vshrl.u32 %v56, 7
    %v58 = vsub.s32 0, %v57
    %v59 = vrot.slane %v54, %v58
    %v61 = vadd.f32 %v52, %v59
    %v62 = vadd.f32 %v53, %v59
    %63 = vst.msk [vmem:[#allocation2] sm:$0xff] %vm17, %v61
    %64 = vst.msk [vmem:[#allocation2 + $0x8] sm:$0xff] %vm17, %v62
    // Predicated region
    $region14: #{encoder_forward.29} parent=1 // pred_check
      _
    $region15: #{encoder_forward.29} parent=1 // pred_check_branch
      %66 = sbr.rel (0) target = $region17
    $region16: #{encoder_forward.29} parent=1 // pred_region
      %s68 = ssub.s32 256, 256
      %69 = vsyncadd [#allocation3], %s68
      %s70 = sshll.u32 [#allocation2], 4
      %s71 = int_to_ptr.vmem [resolvable:$true] %s70
      %76 = dma.vmem_to_hbm [thread:$0]  %s71, 256, %s3, [#allocation3], 128, 128, 8
    $region17: #{encoder_forward.29} parent=1 // pred_fallthru
      _
    // Predicated region
    $region18: #{encoder_forward.29} parent=1 // pred_check
      _
    $region19: #{encoder_forward.29} parent=1 // pred_check_branch
      %78 = sbr.rel (0) target = $region21
    $region20: #{encoder_forward.29} parent=1 // pred_region
      %79 = dma.done [#allocation3], 256
    $region21: #{encoder_forward.29} parent=1 // pred_fallthru
      _
    %80 = vsyncpa [#allocation3], 1

</llo_original>
